<compile_context>
chip_gen: v6e
topology: v6e:2x2x1
jax: 0.10.0
libtpu: 0.0.40
codegen_flags: <defaults>
</compile_context>

<pallas_src>
import numpy as np
import jax
import jax.numpy as jnp
from jax import lax
from jax.experimental import pallas as pl
from jax.experimental.pallas import tpu as pltpu


def _round_up(x, m):
    return ((x + m - 1) // m) * m


def _cdiv(a, b):
    return (a + b - 1) // b


# ---------------------------------------------------------------------------
# Kernel 1: fused FFNN + Conv1d(64->4->2) over packed same-sentence pairs.
# Output is channel-major [2, rows] (lane-dense stores).
# ---------------------------------------------------------------------------
def _make_ffnn_conv_kernel(t_pad, max_len):
    def kernel(x_ref, w1_ref, b1_ref, w2_ref, b2_ref, w3_ref, b3_ref,
               c1w_ref, c1b_ref, c2w_ref, c2b_ref, out_ref):
        rows = x_ref.shape[0]
        # Valid-row mask built in-kernel (no extra [rows,1] input / DMA stream).
        t = lax.broadcasted_iota(jnp.int32, (rows, 1), 0) % t_pad
        mask = (t < max_len).astype(jnp.float32)

        # FFNN: Linear -> ReLU -> Linear -> ReLU -> Linear (Dropout = identity).
        # bf16 operands, f32 accumulation (native MXU path on v6e/v7x).
        x = x_ref[...]
        h = jnp.dot(x, w1_ref[...], preferred_element_type=jnp.float32) + b1_ref[...]
        h = jnp.maximum(h, 0.0)
        h = jnp.dot(h.astype(jnp.bfloat16), w2_ref[...],
                    preferred_element_type=jnp.float32) + b2_ref[...]
        h = jnp.maximum(h, 0.0)
        h = jnp.dot(h.astype(jnp.bfloat16), w3_ref[...],
                    preferred_element_type=jnp.float32) + b3_ref[...]

        # Zero the t >= max_len guard rows so the convs see exactly the zero
        # padding PyTorch's Conv1d(padding=1) sees and per-head sequences never
        # bleed into each other through the +-1 taps.  The ffnn(0) rows inside
        # [length_i, max_len) are intentionally preserved (reference semantics).
        h = h * mask

        def _down(v):   # result[t] = v[t-1]  (zero row shifted in at t = 0)
            return jnp.concatenate([jnp.zeros_like(v[:1]), v[:-1]], axis=0)

        def _up(v):     # result[t] = v[t+1]  (zero row shifted in at the end)
            return jnp.concatenate([v[1:], jnp.zeros_like(v[:1])], axis=0)

        # Conv1d(64 -> 4, k=3, pad=1): ONE fused [64, 12] matmul, then shift
        # only the 4-wide per-tap results (not four full-width copies of h).
        hw = jnp.dot(h, c1w_ref[...], preferred_element_type=jnp.float32)
        y = _down(hw[:, 0:4]) + hw[:, 4:8] + _up(hw[:, 8:12]) + c1b_ref[...]
        y = y * mask    # re-apply boundary zeros before the second conv

        # Conv1d(4 -> 2, k=3, pad=1), computed channel-major so the kernel
        # output is the lane-dense [2, rows] block (unmasked vector stores).
        ycat = jnp.concatenate([_down(y), y, _up(y)], axis=1)       # [rows, 12]
        z = lax.dot_general(c2w_ref[...], ycat,
                            dimension_numbers=(((1,), (1,)), ((), ())),
                            preferred_element_type=jnp.float32) + c2b_ref[...]
        out_ref[...] = z                                            # [2, rows]
    return kernel


# ---------------------------------------------------------------------------
# Kernel 2: softmax over words + eval-mode valid start/end (-inf) masks.
# ---------------------------------------------------------------------------
def _softmax_valid_kernel(s_ref, rel_ref, out_ref):
    s = s_ref[...]                                    # [2, TILE_H, n_words_pad]
    m = jnp.max(s, axis=-1, keepdims=True)
    e = jnp.exp(s - m)
    denom = jnp.sum(e, axis=-1, keepdims=True)        # never 0 by construction
    p = e * pl.reciprocal(denom, approx=True)         # EUP divide (free slot)

    rel = rel_ref[...]                                # [TILE_H, n_words_pad]
    valid_start = jnp.where(rel >= 0, 0.0, -jnp.inf)  # log(rel >= 0)
    valid_end = jnp.where(rel <= 0, 0.0, -jnp.inf)    # log(rel <= 0)
    out_ref[...] = p + jnp.stack([valid_start, valid_end], axis=0)


# ---------------------------------------------------------------------------
# Generation-aware tiling: >=4 balanced grid steps when head count allows
# (v7x: 2 TCs), larger blocks when it does (v6e), <= ~48 MiB working set
# (v7x has only 64 MiB physical VMEM).
# ---------------------------------------------------------------------------
_VMEM_BUDGET = 48 * 1024 * 1024


def _pick_tiling(n_heads, max_len, d_in_pad, h1, h2, h3):
    w_bytes = 2 * ((d_in_pad * h1 + h1 * h2 + h2 * h3) * 2      # bf16 weights
                   + (h1 + h2 + h3) * 4                         # f32 biases
                   + (h3 * 12 + 4 + 2 * 12 + 2) * 4)            # fused conv

    def plan(tile_h):
        # t_pad alignment keeps block_rows = tile_h * t_pad a multiple of 128
        # (lane-dense output block) and >= max_len + 1 (guard row).
        t_pad = _round_up(max_len + 1, max(8, 128 // tile_h))
        rows = tile_h * t_pad
        vmem = (w_bytes
                + 2 * rows * d_in_pad * 2          # double-buffered bf16 input
                + 2 * 2 * rows * 4                 # double-buffered f32 output
                + rows * (h1 + h2 + h3 + 64) * 4)  # in-kernel intermediates
        return t_pad, rows, vmem

    tile_h = 8
    while tile_h > 1 and _cdiv(n_heads, tile_h) < 4:             # grid balance
        tile_h //= 2
    while (tile_h < 64 and _cdiv(n_heads, tile_h * 2) >= 4       # bigger tiles
           and plan(tile_h * 2)[1] <= 1024
           and plan(tile_h * 2)[2] <= _VMEM_BUDGET):
        tile_h *= 2
    while tile_h > 1 and plan(tile_h)[2] > _VMEM_BUDGET:         # fit budget
        tile_h //= 2

    t_pad, _, vmem = plan(tile_h)
    vmem_limit = int(min(56 * 1024 * 1024, max(32 * 1024 * 1024, 2 * vmem)))
    return tile_h, t_pad, vmem_limit


# ---------------------------------------------------------------------------
# One-time weight preparation (kept out of the per-call hot path).
# ---------------------------------------------------------------------------
def prepare_span_predictor_params(params):
    emb = np.asarray(params["emb"], np.float32)
    w1 = np.asarray(params["w1"], np.float32)
    b1 = np.asarray(params["b1"], np.float32)
    w2 = np.asarray(params["w2"], np.float32)
    b2 = np.asarray(params["b2"], np.float32)
    w3 = np.asarray(params["w3"], np.float32)
    b3 = np.asarray(params["b3"], np.float32)
    c1w = np.asarray(params["c1w"], np.float32)      # [4, 64, 3] (PyTorch layout)
    c1b = np.asarray(params["c1b"], np.float32)
    c2w = np.asarray(params["c2w"], np.float32)      # [2, 4, 3]
    c2b = np.asarray(params["c2b"], np.float32)

    d_in = w1.shape[0]
    d_in_pad = _round_up(d_in, 128)                  # lane-clean K for matmul 1
    w1p = np.zeros((d_in_pad, w1.shape[1]), np.float32)
    w1p[:d_in] = w1

    # Fused conv-tap weights: columns [4k:4k+4] of c1w_all are tap k, etc.
    c1w_all = np.concatenate([c1w[:, :, k].T for k in range(3)], axis=1)  # [64,12]
    c2w_all = np.concatenate([c2w[:, :, k] for k in range(3)], axis=1)    # [2,12]

    weights = (
        jnp.asarray(w1p, jnp.bfloat16), jnp.asarray(b1[None, :], jnp.float32),
        jnp.asarray(w2, jnp.bfloat16), jnp.asarray(b2[None, :], jnp.float32),
        jnp.asarray(w3, jnp.bfloat16), jnp.asarray(b3[None, :], jnp.float32),
        jnp.asarray(c1w_all, jnp.float32), jnp.asarray(c1b[None, :], jnp.float32),
        jnp.asarray(c2w_all, jnp.float32), jnp.asarray(c2b[:, None], jnp.float32),
    )
    dims = dict(d_in=d_in, d_in_pad=d_in_pad,
                h1=w1.shape[1], h2=w2.shape[1], h3=w3.shape[1])
    return dict(emb=emb, weights=weights, dims=dims)


# ---------------------------------------------------------------------------
# Wrapper: full SpanPredictor.forward (eval mode). Returns [n_heads, n_words, 2].
# ---------------------------------------------------------------------------
def span_predictor_forward(words, heads_ids, sent_id, prepared):
    words = np.asarray(words, np.float32)
    heads = np.asarray(heads_ids, np.int32)
    sent = np.asarray(sent_id, np.int32)
    n_words = words.shape[0]
    n_heads = int(heads.shape[0])
    emb_tab = prepared["emb"]
    d = prepared["dims"]
    d_in, d_in_pad = d["d_in"], d["d_in_pad"]
    h1, h2, h3 = d["h1"], d["h2"], d["h3"]

    # ---- data-dependent plumbing (mirrors the PyTorch nonzero / pack) ------
    rel = heads[:, None] - np.arange(n_words, dtype=np.int32)[None, :]
    emb_ids = rel + 63
    emb_ids = np.where((emb_ids < 0) | (emb_ids > 126), 127, emb_ids)
    same_sent = sent[heads][:, None] == sent[None, :]
    rows, cols = np.nonzero(same_sent)
    lengths = same_sent.sum(axis=1)
    max_len = int(lengths.max())
    padding_mask = np.arange(max_len)[None, :] < lengths[:, None]

    pair_matrix = np.concatenate(
        [words[heads[rows]], words[cols], emb_tab[emb_ids[rows, cols]]],
        axis=1).astype(np.float32)

    tile_h, t_pad, vmem_limit = _pick_tiling(n_heads, max_len, d_in_pad, h1, h2, h3)
    n_heads_pad = _round_up(n_heads, tile_h)
    block_rows = tile_h * t_pad
    total_rows = n_heads_pad * t_pad
    grid1 = n_heads_pad // tile_h

    padded = np.zeros((n_heads_pad, t_pad, d_in_pad), np.float32)
    padded[:n_heads, :max_len, :d_in][padding_mask] = pair_matrix
    x2d = padded.reshape(total_rows, d_in_pad)

    # Flat gather/scatter indices (host-computed, applied with device ops).
    pm_heads, pm_ts = np.nonzero(padding_mask)
    src_idx = (pm_heads * t_pad + pm_ts).astype(np.int32)

    n_words_pad = _round_up(n_words, 128)
    h_pad2 = _round_up(n_heads, 8)
    grid2 = h_pad2 // 8
    dst_idx = (rows * n_words_pad + cols).astype(np.int32)
    rel_pad = np.zeros((h_pad2, n_words_pad), np.int32)
    rel_pad[:n_heads, :n_words] = rel

    flops = 2 * total_rows * (d_in_pad * h1 + h1 * h2 + h2 * h3 + h3 * 12 + 12 * 2)
    bytes_accessed = (total_rows * d_in_pad * 2 + 2 * total_rows * 4
                      + sum(int(np.prod(w.shape)) * w.dtype.itemsize
                            for w in prepared["weights"]))

    def full(shape):  # whole-array block, constant index -> no per-step re-DMA
        return pl.BlockSpec(shape, lambda i: (0,) * len(shape))

    ffnn_conv = pl.pallas_call(
        _make_ffnn_conv_kernel(t_pad, max_len),
        out_shape=jax.ShapeDtypeStruct((2, total_rows), jnp.float32),
        grid_spec=pltpu.PrefetchScalarGridSpec(
            num_scalar_prefetch=0,
            grid=(grid1,),
            in_specs=[
                pl.BlockSpec((block_rows, d_in_pad), lambda i: (i, 0)),  # pairs
                full((d_in_pad, h1)), full((1, h1)),
                full((h1, h2)), full((1, h2)),
                full((h2, h3)), full((1, h3)),
                full((h3, 12)), full((1, 4)),
                full((2, 12)), full((2, 1)),
            ],
            out_specs=pl.BlockSpec((2, block_rows), lambda i: (0, i)),
        ),
        compiler_params=pltpu.CompilerParams(
            dimension_semantics=("parallel",),
            vmem_limit_bytes=vmem_limit),
        cost_estimate=pl.CostEstimate(flops=int(flops), transcendentals=0,
                                      bytes_accessed=int(bytes_accessed)),
    )

    softmax_valid = pl.pallas_call(
        _softmax_valid_kernel,
        out_shape=jax.ShapeDtypeStruct((2, h_pad2, n_words_pad), jnp.float32),
        grid_spec=pltpu.PrefetchScalarGridSpec(
            num_scalar_prefetch=0,
            grid=(grid2,),
            in_specs=[pl.BlockSpec((2, 8, n_words_pad), lambda i: (0, i, 0)),
                      pl.BlockSpec((8, n_words_pad), lambda i: (i, 0))],
            out_specs=pl.BlockSpec((2, 8, n_words_pad), lambda i: (0, i, 0)),
        ),
        compiler_params=pltpu.CompilerParams(
            dimension_semantics=("parallel",),
            vmem_limit_bytes=32 * 1024 * 1024),
    )

    def _device_forward(x2d_dev, src_dev, dst_dev, rel_dev, *wts):
        res = ffnn_conv(x2d_dev, *wts)                     # [2, total_rows]
        vals = jnp.take(res, src_dev, axis=1)              # [2, n_pairs]
        base = jnp.full((2, h_pad2, n_words_pad), -jnp.inf, jnp.float32)
        base = base.at[:, n_heads:, :].set(0.0)            # padded heads stay finite
        scores = (base.reshape(2, h_pad2 * n_words_pad)
                  .at[:, dst_dev].set(vals)
                  .reshape(2, h_pad2, n_words_pad))
        probs = softmax_valid(scores, rel_dev)             # [2, h_pad2, n_words_pad]
        return jnp.transpose(probs, (1, 2, 0))[:n_heads, :n_words]

    # TODO(synk): in a serving loop the jitted callable would be cached per
    # (max_len, n_pairs, n_heads, n_words) shape signature instead of rebuilt.
    fwd = jax.jit(_device_forward)
    return fwd(jnp.asarray(x2d, jnp.bfloat16),
               jnp.asarray(src_idx), jnp.asarray(dst_idx), jnp.asarray(rel_pad),
               *prepared["weights"])


# ---------------------------------------------------------------------------
# Faithful NumPy/JAX port of SpanPredictor.forward (eval mode) for checking.
# ---------------------------------------------------------------------------
def _reference_forward(words, heads_ids, sent_id, params):
    words = np.asarray(words, np.float32)
    heads = np.asarray(heads_ids, np.int32)
    sent = np.asarray(sent_id, np.int32)
    n_words = words.shape[0]
    n_heads = heads.shape[0]
    emb_tab = np.asarray(params["emb"], np.float32)

    rel = heads[:, None] - np.arange(n_words, dtype=np.int32)[None, :]
    emb_ids = rel + 63
    emb_ids = np.where((emb_ids < 0) | (emb_ids > 126), 127, emb_ids)
    same_sent = sent[heads][:, None] == sent[None, :]
    rows, cols = np.nonzero(same_sent)
    pair_matrix = np.concatenate(
        [words[heads[rows]], words[cols], emb_tab[emb_ids[rows, cols]]], axis=1)
    lengths = same_sent.sum(axis=1)
    max_len = int(lengths.max())
    padding_mask = np.arange(max_len)[None, :] < lengths[:, None]
    padded_pairs = np.zeros((n_heads, max_len, pair_matrix.shape[-1]), np.float32)
    padded_pairs[padding_mask] = pair_matrix

    relu = lambda v: np.maximum(v, 0.0)
    h = relu(padded_pairs @ params["w1"] + params["b1"])
    h = relu(h @ params["w2"] + params["b2"])
    h = h @ params["w3"] + params["b3"]

    def conv1d(x, w, b):      # x: [B, T, Cin], w: [Cout, Cin, 3] (PyTorch layout)
        t = x.shape[1]
        xp = np.pad(x, ((0, 0), (1, 1), (0, 0)))
        out = np.zeros((x.shape[0], t, w.shape[0]), np.float32)
        for k in range(3):
            out += xp[:, k:k + t, :] @ w[:, :, k].T
        return out + b

    res = conv1d(conv1d(h, params["c1w"], params["c1b"]),
                 params["c2w"], params["c2b"])

    scores = np.full((n_heads, n_words, 2), -np.inf, np.float32)
    scores[rows, cols] = res[padding_mask]
    scores = jax.nn.softmax(jnp.asarray(scores), axis=1)
    valid_starts = jnp.log((jnp.asarray(rel) >= 0).astype(jnp.float32))
    valid_ends = jnp.log((jnp.asarray(rel) <= 0).astype(jnp.float32))
    return scores + jnp.stack([valid_starts, valid_ends], axis=2)


if __name__ == "__main__":
    key = jax.random.PRNGKey(0)
    input_size = 32           # contextual word-embedding size
    dist_emb = 64             # the module's architecture requires 64 here
    sent_lengths = [5, 9, 7, 11]                     # 4 sentences, ragged
    n_words = sum(sent_lengths)                      # 32
    sent_id = np.repeat(np.arange(len(sent_lengths)), sent_lengths).astype(np.int32)
    n_heads = 11

    ks = jax.random.split(key, 12)
    words = jax.random.normal(ks[0], (n_words, input_size), jnp.float32)
    heads_ids = jax.random.randint(ks[1], (n_heads,), 0, n_words, dtype=jnp.int32)

    lin = lambda k, fi, fo: 0.08 * jax.random.normal(k, (fi, fo), jnp.float32)
    params = {
        "emb": 0.1 * jax.random.normal(ks[2], (128, dist_emb), jnp.float32),
        "w1": lin(ks[3], 2 * input_size + dist_emb, input_size),
        "b1": 0.05 * jax.random.normal(ks[4], (input_size,), jnp.float32),
        "w2": lin(ks[5], input_size, 256),
        "b2": 0.05 * jax.random.normal(ks[6], (256,), jnp.float32),
        "w3": lin(ks[7], 256, 64),
        "b3": 0.05 * jax.random.normal(ks[8], (64,), jnp.float32),
        "c1w": 0.08 * jax.random.normal(ks[9], (4, 64, 3), jnp.float32),
        "c1b": 0.05 * jax.random.normal(ks[10], (4,), jnp.float32),
        "c2w": 0.08 * jax.random.normal(ks[11], (2, 4, 3), jnp.float32),
        "c2b": np.asarray([0.01, -0.01], np.float32),
    }
    params = {k: np.asarray(v, np.float32) for k, v in params.items()}

    prepared = prepare_span_predictor_params(params)   # one-time weight upload
    out = span_predictor_forward(words, heads_ids, sent_id, prepared)
    out = jax.block_until_ready(out)
    assert out.shape == (n_heads, n_words, 2), out.shape

    ref = np.asarray(_reference_forward(words, heads_ids, sent_id, params))
    out_np = np.asarray(out)

    finite = np.isfinite(ref)
    assert np.array_equal(np.isfinite(out_np), finite), "-inf mask mismatch"
    max_err = float(np.max(np.abs(np.where(finite, out_np - ref, 0.0))))
    # Tolerance covers bf16 FFNN matmuls (f32 accumulation) + approx reciprocal.
    assert np.allclose(np.where(finite, out_np, 0.0),
                       np.where(finite, ref, 0.0),
                       atol=1e-2, rtol=1e-2), max_err

    print("KERNEL_OK")
</pallas_src>

<mosaic_0001>
module attributes {stable_mosaic.version = 11 : i64} {
  func.func @kernel(%arg0: i32, %arg1: memref<128x128xbf16, #tpu.memory_space<vmem>>, %arg2: memref<128x32xbf16, #tpu.memory_space<vmem>>, %arg3: memref<1x32xf32, #tpu.memory_space<vmem>>, %arg4: memref<32x256xbf16, #tpu.memory_space<vmem>>, %arg5: memref<1x256xf32, #tpu.memory_space<vmem>>, %arg6: memref<256x64xbf16, #tpu.memory_space<vmem>>, %arg7: memref<1x64xf32, #tpu.memory_space<vmem>>, %arg8: memref<64x12xf32, #tpu.memory_space<vmem>>, %arg9: memref<1x4xf32, #tpu.memory_space<vmem>>, %arg10: memref<2x12xf32, #tpu.memory_space<vmem>>, %arg11: memref<2x1xf32, #tpu.memory_space<vmem>>, %arg12: memref<2x128xf32, #tpu.memory_space<vmem>>) attributes {dimension_semantics = [#tpu.dimension_semantics<parallel>], iteration_bounds = array<i64: 6>, scalar_prefetch = 0 : i64, scratch_operands = 0 : i64, tpu.core_type = #tpu.core_type<tc>, window_params = [{transform_indices = @transform_0, window_bounds = array<i64: 128, 128>}, {pipeline_mode = #tpu.pipeline_mode<synchronous>, transform_indices = @transform_1, window_bounds = array<i64: 128, 32>}, {pipeline_mode = #tpu.pipeline_mode<synchronous>, transform_indices = @transform_2, window_bounds = array<i64: 1, 32>}, {pipeline_mode = #tpu.pipeline_mode<synchronous>, transform_indices = @transform_3, window_bounds = array<i64: 32, 256>}, {pipeline_mode = #tpu.pipeline_mode<synchronous>, transform_indices = @transform_4, window_bounds = array<i64: 1, 256>}, {pipeline_mode = #tpu.pipeline_mode<synchronous>, transform_indices = @transform_5, window_bounds = array<i64: 256, 64>}, {pipeline_mode = #tpu.pipeline_mode<synchronous>, transform_indices = @transform_6, window_bounds = array<i64: 1, 64>}, {pipeline_mode = #tpu.pipeline_mode<synchronous>, transform_indices = @transform_7, window_bounds = array<i64: 64, 12>}, {pipeline_mode = #tpu.pipeline_mode<synchronous>, transform_indices = @transform_8, window_bounds = array<i64: 1, 4>}, {pipeline_mode = #tpu.pipeline_mode<synchronous>, transform_indices = @transform_9, window_bounds = array<i64: 2, 12>}, {pipeline_mode = #tpu.pipeline_mode<synchronous>, transform_indices = @transform_10, window_bounds = array<i64: 2, 1>}, {transform_indices = @transform_11, window_bounds = array<i64: 2, 128>}]} {
    %0 = tpu.iota {dimensions = array<i32: 0>} : vector<128x1xi32>
    %c64_i32 = arith.constant 64 : i32
    %c0_i32 = arith.constant 0 : i32
    %1 = arith.cmpi eq, %c64_i32, %c0_i32 : i32
    %c1_i32 = arith.constant 1 : i32
    %2 = arith.select %1, %c1_i32, %c64_i32 : i32
    %3 = vector.broadcast %2 : i32 to vector<128x1xi32>
    %4 = arith.remsi %0, %3 : vector<128x1xi32>
    %c0_i32_0 = arith.constant 0 : i32
    %5 = vector.broadcast %c0_i32_0 : i32 to vector<128x1xi32>
    %6 = arith.cmpi ne, %4, %5 : vector<128x1xi32>
    %c0_i32_1 = arith.constant 0 : i32
    %7 = vector.broadcast %c0_i32_1 : i32 to vector<128x1xi32>
    %8 = arith.cmpi slt, %4, %7 : vector<128x1xi32>
    %c0_i32_2 = arith.constant 0 : i32
    %9 = arith.cmpi slt, %2, %c0_i32_2 : i32
    %10 = vector.broadcast %9 : i1 to vector<128x1xi1>
    %11 = vector.broadcast %10 : vector<128x1xi1> to vector<128x1xi1>
    %12 = arith.xori %8, %11 : vector<128x1xi1>
    %13 = arith.andi %12, %6 : vector<128x1xi1>
    %14 = vector.broadcast %2 : i32 to vector<128x1xi32>
    %15 = arith.addi %4, %14 : vector<128x1xi32>
    %16 = arith.select %13, %15, %4 : vector<128x1xi1>, vector<128x1xi32>
    %c11_i32 = arith.constant 11 : i32
    %17 = vector.broadcast %c11_i32 : i32 to vector<128x1xi32>
    %18 = arith.cmpi slt, %16, %17 : vector<128x1xi32>
    %19 = arith.extui %18 : vector<128x1xi1> to vector<128x1xi32>
    %20 = arith.sitofp %19 : vector<128x1xi32> to vector<128x1xf32>
    %c0 = arith.constant 0 : index
    %c0_3 = arith.constant 0 : index
    %21 = vector.load %arg1[%c0, %c0_3] : memref<128x128xbf16, #tpu.memory_space<vmem>>, vector<128x128xbf16>
    %c0_4 = arith.constant 0 : index
    %c0_5 = arith.constant 0 : index
    %22 = vector.load %arg2[%c0_4, %c0_5] : memref<128x32xbf16, #tpu.memory_space<vmem>>, vector<128x32xbf16>
    %cst = arith.constant dense<0.000000e+00> : vector<128x32xf32>
    %23 = tpu.matmul %21, %22, %cst {dimension_numbers = #tpu.dot_dimension_numbers<[1], [0], [0], [1], [0, 0, 1, 1], [], []>} : vector<128x128xbf16>, vector<128x32xbf16>, vector<128x32xf32> -> vector<128x32xf32>
    %c0_6 = arith.constant 0 : index
    %c0_7 = arith.constant 0 : index
    %24 = vector.load %arg3[%c0_6, %c0_7] : memref<1x32xf32, #tpu.memory_space<vmem>>, vector<1x32xf32>
    %25 = vector.broadcast %24 : vector<1x32xf32> to vector<128x32xf32>
    %26 = arith.addf %23, %25 : vector<128x32xf32>
    %cst_8 = arith.constant 0.000000e+00 : f32
    %27 = vector.broadcast %cst_8 : f32 to vector<128x32xf32>
    %28 = arith.maximumf %26, %27 : vector<128x32xf32>
    %29 = arith.truncf %28 : vector<128x32xf32> to vector<128x32xbf16>
    %c0_9 = arith.constant 0 : index
    %c0_10 = arith.constant 0 : index
    %30 = vector.load %arg4[%c0_9, %c0_10] : memref<32x256xbf16, #tpu.memory_space<vmem>>, vector<32x256xbf16>
    %cst_11 = arith.constant dense<0.000000e+00> : vector<128x256xf32>
    %31 = tpu.matmul %29, %30, %cst_11 {dimension_numbers = #tpu.dot_dimension_numbers<[1], [0], [0], [1], [0, 0, 1, 1], [], []>} : vector<128x32xbf16>, vector<32x256xbf16>, vector<128x256xf32> -> vector<128x256xf32>
    %c0_12 = arith.constant 0 : index
    %c0_13 = arith.constant 0 : index
    %32 = vector.load %arg5[%c0_12, %c0_13] : memref<1x256xf32, #tpu.memory_space<vmem>>, vector<1x256xf32>
    %33 = vector.broadcast %32 : vector<1x256xf32> to vector<128x256xf32>
    %34 = arith.addf %31, %33 : vector<128x256xf32>
    %cst_14 = arith.constant 0.000000e+00 : f32
    %35 = vector.broadcast %cst_14 : f32 to vector<128x256xf32>
    %36 = arith.maximumf %34, %35 : vector<128x256xf32>
    %37 = arith.truncf %36 : vector<128x256xf32> to vector<128x256xbf16>
    %c0_15 = arith.constant 0 : index
    %c0_16 = arith.constant 0 : index
    %38 = vector.load %arg6[%c0_15, %c0_16] : memref<256x64xbf16, #tpu.memory_space<vmem>>, vector<256x64xbf16>
    %cst_17 = arith.constant dense<0.000000e+00> : vector<128x64xf32>
    %39 = tpu.matmul %37, %38, %cst_17 {dimension_numbers = #tpu.dot_dimension_numbers<[1], [0], [0], [1], [0, 0, 1, 1], [], []>} : vector<128x256xbf16>, vector<256x64xbf16>, vector<128x64xf32> -> vector<128x64xf32>
    %c0_18 = arith.constant 0 : index
    %c0_19 = arith.constant 0 : index
    %40 = vector.load %arg7[%c0_18, %c0_19] : memref<1x64xf32, #tpu.memory_space<vmem>>, vector<1x64xf32>
    %41 = vector.broadcast %40 : vector<1x64xf32> to vector<128x64xf32>
    %42 = arith.addf %39, %41 : vector<128x64xf32>
    %43 = vector.broadcast %20 : vector<128x1xf32> to vector<128x64xf32>
    %44 = arith.mulf %42, %43 : vector<128x64xf32>
    %c0_20 = arith.constant 0 : index
    %c0_21 = arith.constant 0 : index
    %45 = vector.load %arg8[%c0_20, %c0_21] : memref<64x12xf32, #tpu.memory_space<vmem>>, vector<64x12xf32>
    %cst_22 = arith.constant dense<0.000000e+00> : vector<128x12xf32>
    %46 = tpu.matmul %44, %45, %cst_22 {dimension_numbers = #tpu.dot_dimension_numbers<[1], [0], [0], [1], [0, 0, 1, 1], [], []>} : vector<128x64xf32>, vector<64x12xf32>, vector<128x12xf32> -> vector<128x12xf32>
    %47 = vector.extract_strided_slice %46 {offsets = [0, 0], sizes = [128, 4], strides = [1, 1]} : vector<128x12xf32> to vector<128x4xf32>
    %cst_23 = arith.constant 0.000000e+00 : f32
    %48 = vector.broadcast %cst_23 : f32 to vector<1x4xf32>
    %49 = vector.extract_strided_slice %47 {offsets = [0, 0], sizes = [127, 4], strides = [1, 1]} : vector<128x4xf32> to vector<127x4xf32>
    %50 = tpu.concatenate %48, %49 in 0 : vector<1x4xf32>, vector<127x4xf32> -> vector<128x4xf32>
    %51 = vector.extract_strided_slice %46 {offsets = [0, 4], sizes = [128, 4], strides = [1, 1]} : vector<128x12xf32> to vector<128x4xf32>
    %52 = arith.addf %50, %51 : vector<128x4xf32>
    %53 = vector.extract_strided_slice %46 {offsets = [0, 8], sizes = [128, 4], strides = [1, 1]} : vector<128x12xf32> to vector<128x4xf32>
    %54 = vector.extract_strided_slice %53 {offsets = [1, 0], sizes = [127, 4], strides = [1, 1]} : vector<128x4xf32> to vector<127x4xf32>
    %cst_24 = arith.constant 0.000000e+00 : f32
    %55 = vector.broadcast %cst_24 : f32 to vector<1x4xf32>
    %56 = tpu.concatenate %54, %55 in 0 : vector<127x4xf32>, vector<1x4xf32> -> vector<128x4xf32>
    %57 = arith.addf %52, %56 : vector<128x4xf32>
    %c0_25 = arith.constant 0 : index
    %c0_26 = arith.constant 0 : index
    %58 = vector.load %arg9[%c0_25, %c0_26] : memref<1x4xf32, #tpu.memory_space<vmem>>, vector<1x4xf32>
    %59 = vector.broadcast %58 : vector<1x4xf32> to vector<128x4xf32>
    %60 = arith.addf %57, %59 : vector<128x4xf32>
    %61 = vector.broadcast %20 : vector<128x1xf32> to vector<128x4xf32>
    %62 = arith.mulf %60, %61 : vector<128x4xf32>
    %cst_27 = arith.constant 0.000000e+00 : f32
    %63 = vector.broadcast %cst_27 : f32 to vector<1x4xf32>
    %64 = vector.extract_strided_slice %62 {offsets = [0, 0], sizes = [127, 4], strides = [1, 1]} : vector<128x4xf32> to vector<127x4xf32>
    %65 = tpu.concatenate %63, %64 in 0 : vector<1x4xf32>, vector<127x4xf32> -> vector<128x4xf32>
    %66 = vector.extract_strided_slice %62 {offsets = [1, 0], sizes = [127, 4], strides = [1, 1]} : vector<128x4xf32> to vector<127x4xf32>
    %cst_28 = arith.constant 0.000000e+00 : f32
    %67 = vector.broadcast %cst_28 : f32 to vector<1x4xf32>
    %68 = tpu.concatenate %66, %67 in 0 : vector<127x4xf32>, vector<1x4xf32> -> vector<128x4xf32>
    %69 = tpu.concatenate %65, %62, %68 in 1 : vector<128x4xf32>, vector<128x4xf32>, vector<128x4xf32> -> vector<128x12xf32>
    %c0_29 = arith.constant 0 : index
    %c0_30 = arith.constant 0 : index
    %70 = vector.load %arg10[%c0_29, %c0_30] : memref<2x12xf32, #tpu.memory_space<vmem>>, vector<2x12xf32>
    %cst_31 = arith.constant dense<0.000000e+00> : vector<2x128xf32>
    %71 = tpu.matmul %70, %69, %cst_31 {dimension_numbers = #tpu.dot_dimension_numbers<[1], [1], [0], [0], [0, 0, 1, 0], [], []>} : vector<2x12xf32>, vector<128x12xf32>, vector<2x128xf32> -> vector<2x128xf32>
    %c0_32 = arith.constant 0 : index
    %c0_33 = arith.constant 0 : index
    %72 = vector.load %arg11[%c0_32, %c0_33] : memref<2x1xf32, #tpu.memory_space<vmem>>, vector<2x1xf32>
    %73 = vector.broadcast %72 : vector<2x1xf32> to vector<2x128xf32>
    %74 = arith.addf %71, %73 : vector<2x128xf32>
    %c0_34 = arith.constant 0 : index
    %c0_35 = arith.constant 0 : index
    %75 = vector.load %arg12[%c0_34, %c0_35] : memref<2x128xf32, #tpu.memory_space<vmem>>, vector<2x128xf32>
    tpu.vector_store %arg12[%c0_34, %c0_35], %74 {strides = array<i32>} : memref<2x128xf32, #tpu.memory_space<vmem>>, vector<2x128xf32>,
    return
  }
  func.func @transform_0(%arg0: i32) -> (i32, i32) {
    %c0_i32 = arith.constant 0 : i32
    %c0_i32_0 = arith.constant 0 : i32
    return %arg0, %c0_i32 : i32, i32
  }
  func.func @transform_1(%arg0: i32) -> (i32, i32) {
    %c0_i32 = arith.constant 0 : i32
    %c0_i32_0 = arith.constant 0 : i32
    %c0_i32_1 = arith.constant 0 : i32
    return %c0_i32, %c0_i32_0 : i32, i32
  }
  func.func @transform_2(%arg0: i32) -> (i32, i32) {
    %c0_i32 = arith.constant 0 : i32
    %c0_i32_0 = arith.constant 0 : i32
    %c0_i32_1 = arith.constant 0 : i32
    return %c0_i32, %c0_i32_0 : i32, i32
  }
  func.func @transform_3(%arg0: i32) -> (i32, i32) {
    %c0_i32 = arith.constant 0 : i32
    %c0_i32_0 = arith.constant 0 : i32
    %c0_i32_1 = arith.constant 0 : i32
    return %c0_i32, %c0_i32_0 : i32, i32
  }
  func.func @transform_4(%arg0: i32) -> (i32, i32) {
    %c0_i32 = arith.constant 0 : i32
    %c0_i32_0 = arith.constant 0 : i32
    %c0_i32_1 = arith.constant 0 : i32
    return %c0_i32, %c0_i32_0 : i32, i32
  }
  func.func @transform_5(%arg0: i32) -> (i32, i32) {
    %c0_i32 = arith.constant 0 : i32
    %c0_i32_0 = arith.constant 0 : i32
    %c0_i32_1 = arith.constant 0 : i32
    return %c0_i32, %c0_i32_0 : i32, i32
  }
  func.func @transform_6(%arg0: i32) -> (i32, i32) {
    %c0_i32 = arith.constant 0 : i32
    %c0_i32_0 = arith.constant 0 : i32
    %c0_i32_1 = arith.constant 0 : i32
    return %c0_i32, %c0_i32_0 : i32, i32
  }
  func.func @transform_7(%arg0: i32) -> (i32, i32) {
    %c0_i32 = arith.constant 0 : i32
    %c0_i32_0 = arith.constant 0 : i32
    %c0_i32_1 = arith.constant 0 : i32
    return %c0_i32, %c0_i32_0 : i32, i32
  }
  func.func @transform_8(%arg0: i32) -> (i32, i32) {
    %c0_i32 = arith.constant 0 : i32
    %c0_i32_0 = arith.constant 0 : i32
    %c0_i32_1 = arith.constant 0 : i32
    return %c0_i32, %c0_i32_0 : i32, i32
  }
  func.func @transform_9(%arg0: i32) -> (i32, i32) {
    %c0_i32 = arith.constant 0 : i32
    %c0_i32_0 = arith.constant 0 : i32
    %c0_i32_1 = arith.constant 0 : i32
    return %c0_i32, %c0_i32_0 : i32, i32
  }
  func.func @transform_10(%arg0: i32) -> (i32, i32) {
    %c0_i32 = arith.constant 0 : i32
    %c0_i32_0 = arith.constant 0 : i32
    %c0_i32_1 = arith.constant 0 : i32
    return %c0_i32, %c0_i32_0 : i32, i32
  }
  func.func @transform_11(%arg0: i32) -> (i32, i32) {
    %c0_i32 = arith.constant 0 : i32
    %c0_i32_0 = arith.constant 0 : i32
    return %c0_i32, %arg0 : i32, i32
  }
}

module attributes {stable_mosaic.version = 11 : i64} {
  func.func @_softmax_valid_kernel(%arg0: i32, %arg1: memref<2x8x128xf32, #tpu.memory_space<vmem>>, %arg2: memref<8x128xi32, #tpu.memory_space<vmem>>, %arg3: memref<2x8x128xf32, #tpu.memory_space<vmem>>) attributes {dimension_semantics = [#tpu.dimension_semantics<parallel>], iteration_bounds = array<i64: 2>, scalar_prefetch = 0 : i64, scratch_operands = 0 : i64, tpu.core_type = #tpu.core_type<tc>, window_params = [{transform_indices = @transform_0, window_bounds = array<i64: 2, 8, 128>}, {transform_indices = @transform_1, window_bounds = array<i64: 8, 128>}, {transform_indices = @transform_2, window_bounds = array<i64: 2, 8, 128>}]} {
    %c0 = arith.constant 0 : index
    %c0_0 = arith.constant 0 : index
    %c0_1 = arith.constant 0 : index
    %0 = vector.load %arg1[%c0, %c0_0, %c0_1] : memref<2x8x128xf32, #tpu.memory_space<vmem>>, vector<2x8x128xf32>
    %cst = arith.constant dense<0xFF800000> : vector<2x8xf32>
    %1 = vector.multi_reduction <maximumf>, %0, %cst [2] : vector<2x8x128xf32> to vector<2x8xf32>
    %2 = vector.shape_cast %1 : vector<2x8xf32> to vector<2x8x1xf32>
    %3 = vector.broadcast %2 : vector<2x8x1xf32> to vector<2x8x128xf32>
    %4 = arith.subf %0, %3 : vector<2x8x128xf32>
    %5 = math.exp %4 : vector<2x8x128xf32>
    %cst_2 = arith.constant dense<0.000000e+00> : vector<2x8xf32>
    %6 = vector.multi_reduction <add>, %5, %cst_2 [2] : vector<2x8x128xf32> to vector<2x8xf32>
    %7 = vector.shape_cast %6 : vector<2x8xf32> to vector<2x8x1xf32>
    %8 = tpu.reciprocal %7 {approx = true} : vector<2x8x1xf32> -> vector<2x8x1xf32>
    %9 = vector.broadcast %8 : vector<2x8x1xf32> to vector<2x8x128xf32>
    %10 = arith.mulf %5, %9 : vector<2x8x128xf32>
    %c0_3 = arith.constant 0 : index
    %c0_4 = arith.constant 0 : index
    %11 = vector.load %arg2[%c0_3, %c0_4] : memref<8x128xi32, #tpu.memory_space<vmem>>, vector<8x128xi32>
    %c0_i32 = arith.constant 0 : i32
    %12 = vector.broadcast %c0_i32 : i32 to vector<8x128xi32>
    %13 = arith.cmpi sge, %11, %12 : vector<8x128xi32>
    %cst_5 = arith.constant 0.000000e+00 : f32
    %cst_6 = arith.constant 0xFF800000 : f32
    %14 = vector.broadcast %cst_5 : f32 to vector<8x128xf32>
    %15 = vector.broadcast %cst_6 : f32 to vector<8x128xf32>
    %16 = arith.select %13, %14, %15 : vector<8x128xi1>, vector<8x128xf32>
    %c0_i32_7 = arith.constant 0 : i32
    %17 = vector.broadcast %c0_i32_7 : i32 to vector<8x128xi32>
    %18 = arith.cmpi sle, %11, %17 : vector<8x128xi32>
    %cst_8 = arith.constant 0.000000e+00 : f32
    %cst_9 = arith.constant 0xFF800000 : f32
    %19 = vector.broadcast %cst_8 : f32 to vector<8x128xf32>
    %20 = vector.broadcast %cst_9 : f32 to vector<8x128xf32>
    %21 = arith.select %18, %19, %20 : vector<8x128xi1>, vector<8x128xf32>
    %22 = vector.shape_cast %16 : vector<8x128xf32> to vector<1x8x128xf32>
    %23 = vector.shape_cast %21 : vector<8x128xf32> to vector<1x8x128xf32>
    %24 = tpu.concatenate %22, %23 in 0 : vector<1x8x128xf32>, vector<1x8x128xf32> -> vector<2x8x128xf32>
    %25 = arith.addf %10, %24 : vector<2x8x128xf32>
    %c0_10 = arith.constant 0 : index
    %c0_11 = arith.constant 0 : index
    %c0_12 = arith.constant 0 : index
    %26 = vector.load %arg3[%c0_10, %c0_11, %c0_12] : memref<2x8x128xf32, #tpu.memory_space<vmem>>, vector<2x8x128xf32>
    tpu.vector_store %arg3[%c0_10, %c0_11, %c0_12], %25 {strides = array<i32>} : memref<2x8x128xf32, #tpu.memory_space<vmem>>, vector<2x8x128xf32>,
    return
  }
  func.func @transform_0(%arg0: i32) -> (i32, i32, i32) {
    %c0_i32 = arith.constant 0 : i32
    %c0_i32_0 = arith.constant 0 : i32
    %c0_i32_1 = arith.constant 0 : i32
    return %c0_i32, %arg0, %c0_i32_0 : i32, i32, i32
  }
  func.func @transform_1(%arg0: i32) -> (i32, i32) {
    %c0_i32 = arith.constant 0 : i32
    %c0_i32_0 = arith.constant 0 : i32
    return %arg0, %c0_i32 : i32, i32
  }
  func.func @transform_2(%arg0: i32) -> (i32, i32, i32) {
    %c0_i32 = arith.constant 0 : i32
    %c0_i32_0 = arith.constant 0 : i32
    %c0_i32_1 = arith.constant 0 : i32
    return %c0_i32, %arg0, %c0_i32_0 : i32, i32, i32
  }
}

</mosaic_0001>

<llo_original>
// kernel: _device_forward.3
$region0: #{_device_forward.3}
  #allocation0 [shape = 'u32[]', space=smem, size = 0x4, offset = 0x4, fixed_abs, tag = 'smem constant byte address 0x4 - core index']
  #allocation1 [shape = 'u32[144,128]{1,0:T(1,128)}', space=vmem, size = 0x12000, scoped, tag = 'internal scratch']
  %s0 = inlined_call_operand.vmem [shape: f32[2,16,128], index: 0, kind: input, shape index: {}]
  %s1 = inlined_call_operand.vmem [shape: s32[16,128], index: 1, kind: input, shape index: {}]
  %s2 = inlined_call_operand.vmem [shape: f32[2,16,128], index: 2, kind: output, shape index: {}]
  %s3 = sld [smem:[#allocation0]]
  $region113: #{_device_forward.3} parent=0
    _
  %s5 = ssub.s32 1, %s3
  %s6 = scalar_select 0, %s5, %s3
  $region1: #{_device_forward.3} parent=0
    #allocation2 [shape = 'u8[16384]{0}', space=vmem, size = 0x4000, scoped, tag = 'input window, operand 0']
    #allocation3 [shape = 'u8[16384]{0}', space=vmem, size = 0x4000, scoped, tag = 'output window, operand 0']
    loop: start=0, step=1, limit=4
    $region2: #{_device_forward.3} parent=1 // loop_pre_header
      _
    $region3: #{_device_forward.3} parent=1 // loop_header
      %s8 = sphi 0, %s12
      %p9 = scmp.ge.s32.totalorder %s8, 4
      %s18 = sphi 0, %s20
      %s21 = sphi 0, %s18
      %s22 = sphi 0, %s21
      %s38 = sphi 0, %s22
      %s44 = sphi 0, %s46
      %s47 = sphi 0, %s44
      %s48 = sphi 0, %s47
      %s64 = sphi 0, %s48
      %s70 = sphi 0, %s72
      %s73 = sphi 0, %s70
      %s74 = sphi 0, %s73
      %s90 = sphi 0, %s74
    $region4: #{_device_forward.3} parent=1 // loop_header_branch
      %11 = sbr.rel (%p9) target = $region8
    $region5: #{_device_forward.3} parent=1 // loop_body
      %s13 = ssub.s32 %s8, 1
      %s14 = ssub.s32 %s8, 2
      %s15 = sadd.s32 %s8, 1
      %s16 = ssub.s32 %s8, %s15
      %p17 = scmp.eq.s32.totalorder %s16, 0
      %s19 = sadd.s32 %s18, 1
      %s20 = scalar_select %p17, %s18, %s19
      %p23 = pneg %p17
      %p24 = scmp.eq.s32.totalorder %s8, 1
      %p25 = por %p23, %p24
      %p26 = scmp.ne.s32.totalorder %s18, %s21
      %p27 = scmp.eq.s32.totalorder %s8, 0
      %p28 = por %p26, %p27
      %p29 = scmp.ne.s32.totalorder %s18, %s21
      %p30 = scmp.eq.s32.totalorder %s13, 1
      %p31 = por %p29, %p30
      %p32 = scmp.ne.s32.totalorder %s21, %s22
      %p33 = scmp.eq.s32.totalorder %s13, 0
      %p34 = por %p32, %p33
      %p35 = scmp.ne.s32.totalorder %s21, %s22
      %p36 = scmp.eq.s32.totalorder %s14, 1
      %p37 = por %p35, %p36
      %p39 = scmp.ne.s32.totalorder %s22, %s38
      %p40 = scmp.eq.s32.totalorder %s14, 0
      %p41 = por %p39, %p40
      %s42 = ssub.s32 %s8, %s15
      %p43 = scmp.eq.s32.totalorder %s42, 0
      %s45 = sadd.s32 %s44, 1
      %s46 = scalar_select %p43, %s44, %s45
      %p49 = pneg %p43
      %p50 = scmp.eq.s32.totalorder %s8, 1
      %p51 = por %p49, %p50
      %p52 = scmp.ne.s32.totalorder %s44, %s47
      %p53 = scmp.eq.s32.totalorder %s8, 0
      %p54 = por %p52, %p53
      %p55 = scmp.ne.s32.totalorder %s44, %s47
      %p56 = scmp.eq.s32.totalorder %s13, 1
      %p57 = por %p55, %p56
      %p58 = scmp.ne.s32.totalorder %s47, %s48
      %p59 = scmp.eq.s32.totalorder %s13, 0
      %p60 = por %p58, %p59
      %p61 = scmp.ne.s32.totalorder %s47, %s48
      %p62 = scmp.eq.s32.totalorder %s14, 1
      %p63 = por %p61, %p62
      %p65 = scmp.ne.s32.totalorder %s48, %s64
      %p66 = scmp.eq.s32.totalorder %s14, 0
      %p67 = por %p65, %p66
      %s68 = ssub.s32 %s8, %s15
      %p69 = scmp.eq.s32.totalorder %s68, 0
      %s71 = sadd.s32 %s70, 1
      %s72 = scalar_select %p69, %s70, %s71
      %p75 = pneg %p69
      %p76 = scmp.eq.s32.totalorder %s8, 1
      %p77 = por %p75, %p76
      %p78 = scmp.ne.s32.totalorder %s70, %s73
      %p79 = scmp.eq.s32.totalorder %s8, 0
      %p80 = por %p78, %p79
      %p81 = scmp.ne.s32.totalorder %s70, %s73
      %p82 = scmp.eq.s32.totalorder %s13, 1
      %p83 = por %p81, %p82
      %p84 = scmp.ne.s32.totalorder %s73, %s74
      %p85 = scmp.eq.s32.totalorder %s13, 0
      %p86 = por %p84, %p85
      %p87 = scmp.ne.s32.totalorder %s73, %s74
      %p88 = scmp.eq.s32.totalorder %s14, 1
      %p89 = por %p87, %p88
      %p91 = scmp.ne.s32.totalorder %s74, %s90
      %p92 = scmp.eq.s32.totalorder %s14, 0
      %p93 = por %p91, %p92
      %p94 = scmp.le.s32.totalorder 1, %s8
      %p95 = scmp.lt.s32.totalorder %s8, 3
      %p96 = pnand %p94, %p95
      %p97 = pneg %p96
      // Predicated region
      $region9: #{_device_forward.3} parent=5 // pred_check
        _
      $region10: #{_device_forward.3} parent=5 // pred_check_branch
        %99 = sbr.rel (%p96) target = $region12
      $region11: #{_device_forward.3} parent=5 // pred_region
        %s100 = ssub.s32 %s8, 1
      $region12: #{_device_forward.3} parent=5 // pred_fallthru
        _
      %p101 = scmp.lt.s32.totalorder %s8, 2
      // Predicated region
      $region13: #{_device_forward.3} parent=5 // pred_check
        %p102 = pneg %p101
      $region14: #{_device_forward.3} parent=5 // pred_check_branch
        %104 = sbr.rel (%p102) target = $region16
      $region15: #{_device_forward.3} parent=5 // pred_region
        // Predicated region
        $region17: #{_device_forward.3} parent=15 // pred_check
          %p105 = pneg %p28
        $region18: #{_device_forward.3} parent=15 // pred_check_branch
          %107 = sbr.rel (%p105) target = $region20
        $region19: #{_device_forward.3} parent=15 // pred_region
          %s108 = sand.u32 %s18, 1
          %s109 = sand.u32 %s18, 1
          %s110 = smul.addr %s109, 16
          %s111 = scalar_lea.vmem [#allocation2], %s110
          %s112 = smul.addr %s8, 8
          %s113 = scalar_lea.vmem %s0, %s112
          // Predicated region
          $region21: #{_device_forward.3} parent=19 // pred_check
            _
          $region22: #{_device_forward.3} parent=19 // pred_check_branch
            %115 = sbr.rel (0) target = $region24
          $region23: #{_device_forward.3} parent=19 // pred_region
            // Predicated region
            $region25: #{_device_forward.3} parent=23 // pred_check
              _
            $region26: #{_device_forward.3} parent=23 // pred_check_branch
              %117 = sbr.rel (0) target = $region28
            $region27: #{_device_forward.3} parent=23 // pred_region
              // Predicated region
              $region40: #{_device_forward.3} parent=27 // pred_check
                _
              $region41: #{_device_forward.3} parent=27 // pred_check_branch
                %135 = sbr.rel (0) target = $region43
              $region42: #{_device_forward.3} parent=27 // pred_region
                loop: start=0, step=1, limit=1
                $region44: #{_device_forward.3} parent=42 // loop_pre_header
                  _
                $region45: #{_device_forward.3} parent=42 // loop_header
                  %s137 = sphi 0, %s141
                  %p138 = scmp.ge.s32.totalorder %s137, 1
                  %s142 = sphi %s113, %s113
                  %s143 = sphi %s111, %s111
                $region46: #{_device_forward.3} parent=42 // loop_header_branch
                  %140 = sbr.rel (%p138) target = $region50
                $region47: #{_device_forward.3} parent=42 // loop_body
                  %v144 = vld [vmem:[%s142] sm:$0xff]
                  %145 = vst [vmem:[%s143] sm:$0xff] %v144
                  %v146 = vld [vmem:[%s142 + $0x10] sm:$0xff]
                  %147 = vst [vmem:[%s143 + $0x8] sm:$0xff] %v146
                $region48: #{_device_forward.3} parent=42 // loop_footer
                  %s141 = sadd.s32 1, %s137
                $region49: #{_device_forward.3} parent=42 // loop_footer_branch
                  %136 = sbr.rel target = $region45
                $region50: #{_device_forward.3} parent=42 // loop_exit
                  _
              $region43: #{_device_forward.3} parent=27 // pred_fallthru
                _
              // Predicated region
              $region51: #{_device_forward.3} parent=27 // pred_check
                _
              $region52: #{_device_forward.3} parent=27 // pred_check_branch
                %149 = sbr.rel target = $region54
              $region53: #{_device_forward.3} parent=27 // pred_region
                _
              $region54: #{_device_forward.3} parent=27 // pred_fallthru
                _
            $region28: #{_device_forward.3} parent=23 // pred_fallthru
              _
            // Predicated region
            $region29: #{_device_forward.3} parent=23 // pred_check
              _
            $region30: #{_device_forward.3} parent=23 // pred_check_branch
              %119 = sbr.rel target = $region32
            $region31: #{_device_forward.3} parent=23 // pred_region
              %s121 = ssub.s32 256, 1
              loop: start=0, step=1, limit=1
              $region33: #{_device_forward.3} parent=31 // loop_pre_header
                _
              $region34: #{_device_forward.3} parent=31 // loop_header
                %s123 = sphi 0, %s127
                %p124 = scmp.ge.s32.totalorder %s123, 1
                %s128 = sphi %s113, %s113
                %s129 = sphi %s111, %s111
              $region35: #{_device_forward.3} parent=31 // loop_header_branch
                %126 = sbr.rel (%p124) target = $region39
              $region36: #{_device_forward.3} parent=31 // loop_body
                %v130 = vld [vmem:[%s128] sm:%s121]
                %131 = vst [vmem:[%s129] sm:%s121] %v130
                %v132 = vld [vmem:[%s128 + $0x10] sm:%s121]
                %133 = vst [vmem:[%s129 + $0x8] sm:%s121] %v132
              $region37: #{_device_forward.3} parent=31 // loop_footer
                %s127 = sadd.s32 1, %s123
              $region38: #{_device_forward.3} parent=31 // loop_footer_branch
                %122 = sbr.rel target = $region34
              $region39: #{_device_forward.3} parent=31 // loop_exit
                _
            $region32: #{_device_forward.3} parent=23 // pred_fallthru
              _
          $region24: #{_device_forward.3} parent=19 // pred_fallthru
            _
          %150 = vnop
        $region20: #{_device_forward.3} parent=15 // pred_fallthru
          _
        // Predicated region
        $region55: #{_device_forward.3} parent=15 // pred_check
          %p151 = pneg %p54
        $region56: #{_device_forward.3} parent=15 // pred_check_branch
          %153 = sbr.rel (%p151) target = $region58
        $region57: #{_device_forward.3} parent=15 // pred_region
          %p154 = scmp.lt.s32.totalorder %s8, 1
          %s155 = scalar_select %p154, %s8, 1
          %s156 = smul.addr %s155, 8
          %s157 = scalar_lea.vmem %s1, %s156
        $region58: #{_device_forward.3} parent=15 // pred_fallthru
          _
      $region16: #{_device_forward.3} parent=5 // pred_fallthru
        _
      %p158 = scmp.le.s32.totalorder 1, %s8
      %p159 = scmp.lt.s32.totalorder %s8, 3
      %p160 = pnand %p158, %p159
      %p161 = pneg %p160
      // Predicated region
      $region59: #{_device_forward.3} parent=5 // pred_check
        _
      $region60: #{_device_forward.3} parent=5 // pred_check_branch
        %163 = sbr.rel (%p160) target = $region62
      $region61: #{_device_forward.3} parent=5 // pred_region
        %s164 = ssub.s32 %s8, 1
        %s165 = sand.u32 %s21, 1
        %s166 = sand.u32 %s21, 1
        %s167 = smul.addr %s166, 16
        %s168 = scalar_lea.vmem [#allocation2], %s167
        // Predicated region
        $region63: #{_device_forward.3} parent=61 // pred_check
          %p169 = pneg %p34
        $region64: #{_device_forward.3} parent=61 // pred_check_branch
          %171 = sbr.rel (%p169) target = $region66
        $region65: #{_device_forward.3} parent=61 // pred_region
          _
        $region66: #{_device_forward.3} parent=61 // pred_fallthru
          _
        %s172 = sand.u32 %s21, 1
        %s173 = sand.u32 %s21, 1
        %s174 = smul.addr %s173, 16
        %s175 = scalar_lea.vmem [#allocation2], %s174
        %p176 = pneg %p34
        %p177 = pneg %p31
        %p178 = scmp.lt.s32.totalorder %s13, 1
        %s179 = scalar_select %p178, %s13, 1
        %s180 = smul.addr %s179, 8
        %s181 = scalar_lea.vmem %s1, %s180
        %p182 = pneg %p60
        %p183 = pneg %p57
        %p184 = pneg %p86
        %p185 = pneg %p83
        %s186 = sand.u32 %s73, 1
        %s187 = sand.u32 %s73, 1
        %s188 = smul.addr %s187, 16
        %s189 = scalar_lea.vmem [#allocation3], %s188
        %p190 = scmp.lt.s32.totalorder %s13, 1
        %s191 = scalar_select %p190, %s13, 1
        %s192 = smul.addr %s191, 8
        %s193 = scalar_lea.vmem %s1, %s192
        %v194 = vld [vmem:[%s168] sm:$0xff]
        %v195 = vld [vmem:[%s168 + $0x8] sm:$0xff]
        %196 = vmax.xlane.f32.xlu0 %v194
        %v197 = vpop.xlane.xlu0 %196
        %198 = vmax.xlane.f32.xlu0 %v195
        %v199 = vpop.xlane.xlu0 %198
        %v200 = vsub.f32 %v194, %v197
        %v201 = vsub.f32 %v195, %v199
        %v202 = vmul.f32 %v200, 1.442695
        %v203 = vpow.pop %v202
        %v204 = vmul.f32 %v201, 1.442695
        %v205 = vpow.pop %v204
        %206 = vadd.xlane.f32.xlu0 %v203
        %v207 = vpop.xlane.xlu0 %206
        %208 = vadd.xlane.f32.xlu0 %v205
        %v209 = vpop.xlane.xlu0 %208
        %v210 = vrcp.pop %v207
        %v211 = vrcp.pop %v209
        %v212 = vmul.f32 %v203, %v210
        %v213 = vmul.f32 %v205, %v211
        %v214 = vld [vmem:[%s193] sm:$0xff]
        %vm215 = vcmp.ge.s32.totalorder %v214, 0
        %v216 = vsel %vm215, 0.0, -inf
        %vm217 = vcmp.le.s32.totalorder %v214, 0
        %v218 = vsel %vm217, 0.0, -inf
        %v219 = vadd.f32 %v212, %v216
        %v220 = vadd.f32 %v213, %v218
        %221 = vst [vmem:[%s189] sm:$0xff] %v219
        %222 = vst [vmem:[%s189 + $0x8] sm:$0xff] %v220
        %s223 = sand.u32 %s73, 1
        %s224 = sand.u32 %s73, 1
        %s225 = smul.addr %s224, 16
        %s226 = scalar_lea.vmem [#allocation3], %s225
        // Predicated region
        $region67: #{_device_forward.3} parent=61 // pred_check
          %p227 = pneg %p83
        $region68: #{_device_forward.3} parent=61 // pred_check_branch
          %229 = sbr.rel (%p227) target = $region70
        $region69: #{_device_forward.3} parent=61 // pred_region
          %s230 = smul.addr %s13, 8
          %s231 = scalar_lea.vmem %s2, %s230
          // Predicated region
          $region71: #{_device_forward.3} parent=69 // pred_check
            _
          $region72: #{_device_forward.3} parent=69 // pred_check_branch
            %233 = sbr.rel (0) target = $region74
          $region73: #{_device_forward.3} parent=69 // pred_region
            // Predicated region
            $region75: #{_device_forward.3} parent=73 // pred_check
              _
            $region76: #{_device_forward.3} parent=73 // pred_check_branch
              %235 = sbr.rel (0) target = $region78
            $region77: #{_device_forward.3} parent=73 // pred_region
              // Predicated region
              $region90: #{_device_forward.3} parent=77 // pred_check
                _
              $region91: #{_device_forward.3} parent=77 // pred_check_branch
                %253 = sbr.rel (0) target = $region93
              $region92: #{_device_forward.3} parent=77 // pred_region
                loop: start=0, step=1, limit=1
                $region94: #{_device_forward.3} parent=92 // loop_pre_header
                  _
                $region95: #{_device_forward.3} parent=92 // loop_header
                  %s255 = sphi 0, %s259
                  %p256 = scmp.ge.s32.totalorder %s255, 1
                  %s260 = sphi %s226, %s226
                  %s261 = sphi %s231, %s231
                $region96: #{_device_forward.3} parent=92 // loop_header_branch
                  %258 = sbr.rel (%p256) target = $region100
                $region97: #{_device_forward.3} parent=92 // loop_body
                  %v262 = vld [vmem:[%s260] sm:$0xff]
                  %263 = vst [vmem:[%s261] sm:$0xff] %v262
                  %v264 = vld [vmem:[%s260 + $0x8] sm:$0xff]
                  %265 = vst [vmem:[%s261 + $0x10] sm:$0xff] %v264
                $region98: #{_device_forward.3} parent=92 // loop_footer
                  %s259 = sadd.s32 1, %s255
                $region99: #{_device_forward.3} parent=92 // loop_footer_branch
                  %254 = sbr.rel target = $region95
                $region100: #{_device_forward.3} parent=92 // loop_exit
                  _
              $region93: #{_device_forward.3} parent=77 // pred_fallthru
                _
              // Predicated region
              $region101: #{_device_forward.3} parent=77 // pred_check
                _
              $region102: #{_device_forward.3} parent=77 // pred_check_branch
                %267 = sbr.rel target = $region104
              $region103: #{_device_forward.3} parent=77 // pred_region
                _
              $region104: #{_device_forward.3} parent=77 // pred_fallthru
                _
            $region78: #{_device_forward.3} parent=73 // pred_fallthru
              _
            // Predicated region
            $region79: #{_device_forward.3} parent=73 // pred_check
              _
            $region80: #{_device_forward.3} parent=73 // pred_check_branch
              %237 = sbr.rel target = $region82
            $region81: #{_device_forward.3} parent=73 // pred_region
              %s239 = ssub.s32 256, 1
              loop: start=0, step=1, limit=1
              $region83: #{_device_forward.3} parent=81 // loop_pre_header
                _
              $region84: #{_device_forward.3} parent=81 // loop_header
                %s241 = sphi 0, %s245
                %p242 = scmp.ge.s32.totalorder %s241, 1
                %s246 = sphi %s226, %s226
                %s247 = sphi %s231, %s231
              $region85: #{_device_forward.3} parent=81 // loop_header_branch
                %244 = sbr.rel (%p242) target = $region89
              $region86: #{_device_forward.3} parent=81 // loop_body
                %v248 = vld [vmem:[%s246] sm:%s239]
                %249 = vst [vmem:[%s247] sm:%s239] %v248
                %v250 = vld [vmem:[%s246 + $0x8] sm:%s239]
                %251 = vst [vmem:[%s247 + $0x10] sm:%s239] %v250
              $region87: #{_device_forward.3} parent=81 // loop_footer
                %s245 = sadd.s32 1, %s241
              $region88: #{_device_forward.3} parent=81 // loop_footer_branch
                %240 = sbr.rel target = $region84
              $region89: #{_device_forward.3} parent=81 // loop_exit
                _
            $region82: #{_device_forward.3} parent=73 // pred_fallthru
              _
          $region74: #{_device_forward.3} parent=69 // pred_fallthru
            _
          %268 = vnop
        $region70: #{_device_forward.3} parent=61 // pred_fallthru
          _
      $region62: #{_device_forward.3} parent=5 // pred_fallthru
        _
      %p269 = scmp.le.s32.totalorder 2, %s8
      // Predicated region
      $region105: #{_device_forward.3} parent=5 // pred_check
        %p270 = pneg %p269
      $region106: #{_device_forward.3} parent=5 // pred_check_branch
        %272 = sbr.rel (%p270) target = $region108
      $region107: #{_device_forward.3} parent=5 // pred_region
        %s273 = ssub.s32 %s8, 2
        // Predicated region
        $region109: #{_device_forward.3} parent=107 // pred_check
          %p274 = pneg %p89
        $region110: #{_device_forward.3} parent=107 // pred_check_branch
          %276 = sbr.rel (%p274) target = $region112
        $region111: #{_device_forward.3} parent=107 // pred_region
          %s277 = sand.u32 %s74, 1
          %s278 = sand.u32 %s74, 1
          %s279 = smul.addr %s278, 16
          %s280 = scalar_lea.vmem [#allocation3], %s279
        $region112: #{_device_forward.3} parent=107 // pred_fallthru
          _
      $region108: #{_device_forward.3} parent=5 // pred_fallthru
        _
    $region6: #{_device_forward.3} parent=1 // loop_footer
      %s12 = sadd.s32 1, %s8
    $region7: #{_device_forward.3} parent=1 // loop_footer_branch
      %7 = sbr.rel target = $region3
    $region8: #{_device_forward.3} parent=1 // loop_exit
      _

// kernel: _device_forward.2
$region0: #{_device_forward.2}
  #allocation0 [shape = 'u32[]', space=smem, size = 0x4, offset = 0x4, fixed_abs, tag = 'smem constant byte address 0x4 - core index']
  #allocation1 [shape = 'u32[144,128]{1,0:T(1,128)}', space=vmem, size = 0x12000, scoped, tag = 'internal scratch']
  %s0 = inlined_call_operand.hbm [shape: bf16[768,128], index: 0, kind: input, shape index: {}]
  %s1 = inlined_call_operand.vmem [shape: bf16[128,32], index: 1, kind: input, shape index: {}]
  %s2 = inlined_call_operand.vmem [shape: f32[1,32], index: 2, kind: input, shape index: {}]
  %s3 = inlined_call_operand.vmem [shape: bf16[32,256], index: 3, kind: input, shape index: {}]
  %s4 = inlined_call_operand.vmem [shape: f32[1,256], index: 4, kind: input, shape index: {}]
  %s5 = inlined_call_operand.vmem [shape: bf16[256,64], index: 5, kind: input, shape index: {}]
  %s6 = inlined_call_operand.vmem [shape: f32[1,64], index: 6, kind: input, shape index: {}]
  %s7 = inlined_call_operand.vmem [shape: f32[64,12], index: 7, kind: input, shape index: {}]
  %s8 = inlined_call_operand.vmem [shape: f32[1,4], index: 8, kind: input, shape index: {}]
  %s9 = inlined_call_operand.vmem [shape: f32[2,12], index: 9, kind: input, shape index: {}]
  %s10 = inlined_call_operand.vmem [shape: f32[2,1], index: 10, kind: input, shape index: {}]
  %s11 = inlined_call_operand.vmem [shape: f32[2,768], index: 11, kind: output, shape index: {}]
  %s12 = sld [smem:[#allocation0]]
  $region81: #{_device_forward.2} parent=0
    _
  %s14 = ssub.s32 1, %s12
  %s15 = scalar_select 0, %s14, %s12
  $region1: #{_device_forward.2} parent=0
    #allocation2 [shape = 'u8[65536]{0}', space=vmem, size = 0x10000, scoped, tag = 'input window, operand 0']
    #allocation3 [shape = 's32[2]{0}', space=sflag, size = 0x8, scoped, tag = 'scoped memory for _device_forward.2']
    %16 = vsyncpa [#allocation3], 0
    %s17 = scalar_lea.sflag [#allocation3], 1
    %18 = vsyncpa %s17, 0
    loop: start=0, step=1, limit=8
    $region2: #{_device_forward.2} parent=1 // loop_pre_header
      _
    $region3: #{_device_forward.2} parent=1 // loop_header
      %s20 = sphi 0, %s24
      %p21 = scmp.ge.s32.totalorder %s20, 8
      %s30 = sphi 0, %s32
      %s33 = sphi 0, %s30
      %s34 = sphi 0, %s33
      %s50 = sphi 0, %s34
      %s54 = sphi 0, %s54
      %s56 = sphi 0, %s54
      %s57 = sphi 0, %s56
      %s71 = sphi 0, %s57
      %s75 = sphi 0, %s75
      %s77 = sphi 0, %s75
      %s78 = sphi 0, %s77
      %s92 = sphi 0, %s78
      %s96 = sphi 0, %s96
      %s98 = sphi 0, %s96
      %s99 = sphi 0, %s98
      %s113 = sphi 0, %s99
      %s117 = sphi 0, %s117
      %s119 = sphi 0, %s117
      %s120 = sphi 0, %s119
      %s134 = sphi 0, %s120
      %s138 = sphi 0, %s138
      %s140 = sphi 0, %s138
      %s141 = sphi 0, %s140
      %s155 = sphi 0, %s141
      %s159 = sphi 0, %s159
      %s161 = sphi 0, %s159
      %s162 = sphi 0, %s161
      %s176 = sphi 0, %s162
      %s180 = sphi 0, %s180
      %s182 = sphi 0, %s180
      %s183 = sphi 0, %s182
      %s197 = sphi 0, %s183
      %s201 = sphi 0, %s201
      %s203 = sphi 0, %s201
      %s204 = sphi 0, %s203
      %s218 = sphi 0, %s204
      %s222 = sphi 0, %s222
      %s224 = sphi 0, %s222
      %s225 = sphi 0, %s224
      %s239 = sphi 0, %s225
      %s243 = sphi 0, %s243
      %s245 = sphi 0, %s243
      %s246 = sphi 0, %s245
      %s260 = sphi 0, %s246
      %s266 = sphi 0, %s268
      %s269 = sphi 0, %s266
      %s270 = sphi 0, %s269
      %s286 = sphi 0, %s270
    $region4: #{_device_forward.2} parent=1 // loop_header_branch
      %23 = sbr.rel (%p21) target = $region8
    $region5: #{_device_forward.2} parent=1 // loop_body
      %s25 = ssub.s32 %s20, 1
      %s26 = ssub.s32 %s20, 2
      %s27 = sadd.s32 %s20, 1
      %s28 = ssub.s32 %s20, %s27
      %p29 = scmp.eq.s32.totalorder %s28, 0
      %s31 = sadd.s32 %s30, 1
      %s32 = scalar_select %p29, %s30, %s31
      %p35 = pneg %p29
      %p36 = scmp.eq.s32.totalorder %s20, 5
      %p37 = por %p35, %p36
      %p38 = scmp.ne.s32.totalorder %s30, %s33
      %p39 = scmp.eq.s32.totalorder %s20, 0
      %p40 = por %p38, %p39
      %p41 = scmp.ne.s32.totalorder %s30, %s33
      %p42 = scmp.eq.s32.totalorder %s25, 5
      %p43 = por %p41, %p42
      %p44 = scmp.ne.s32.totalorder %s33, %s34
      %p45 = scmp.eq.s32.totalorder %s25, 0
      %p46 = por %p44, %p45
      %p47 = scmp.ne.s32.totalorder %s33, %s34
      %p48 = scmp.eq.s32.totalorder %s26, 5
      %p49 = por %p47, %p48
      %p51 = scmp.ne.s32.totalorder %s34, %s50
      %p52 = scmp.eq.s32.totalorder %s26, 0
      %p53 = por %p51, %p52
      %s55 = sadd.s32 %s54, 1
      %p58 = scmp.eq.s32.totalorder %s20, 5
      %p59 = scmp.ne.s32.totalorder %s54, %s56
      %p60 = scmp.eq.s32.totalorder %s20, 0
      %p61 = por %p59, %p60
      %p62 = scmp.ne.s32.totalorder %s54, %s56
      %p63 = scmp.eq.s32.totalorder %s25, 5
      %p64 = por %p62, %p63
      %p65 = scmp.ne.s32.totalorder %s56, %s57
      %p66 = scmp.eq.s32.totalorder %s25, 0
      %p67 = por %p65, %p66
      %p68 = scmp.ne.s32.totalorder %s56, %s57
      %p69 = scmp.eq.s32.totalorder %s26, 5
      %p70 = por %p68, %p69
      %p72 = scmp.ne.s32.totalorder %s57, %s71
      %p73 = scmp.eq.s32.totalorder %s26, 0
      %p74 = por %p72, %p73
      %s76 = sadd.s32 %s75, 1
      %p79 = scmp.eq.s32.totalorder %s20, 5
      %p80 = scmp.ne.s32.totalorder %s75, %s77
      %p81 = scmp.eq.s32.totalorder %s20, 0
      %p82 = por %p80, %p81
      %p83 = scmp.ne.s32.totalorder %s75, %s77
      %p84 = scmp.eq.s32.totalorder %s25, 5
      %p85 = por %p83, %p84
      %p86 = scmp.ne.s32.totalorder %s77, %s78
      %p87 = scmp.eq.s32.totalorder %s25, 0
      %p88 = por %p86, %p87
      %p89 = scmp.ne.s32.totalorder %s77, %s78
      %p90 = scmp.eq.s32.totalorder %s26, 5
      %p91 = por %p89, %p90
      %p93 = scmp.ne.s32.totalorder %s78, %s92
      %p94 = scmp.eq.s32.totalorder %s26, 0
      %p95 = por %p93, %p94
      %s97 = sadd.s32 %s96, 1
      %p100 = scmp.eq.s32.totalorder %s20, 5
      %p101 = scmp.ne.s32.totalorder %s96, %s98
      %p102 = scmp.eq.s32.totalorder %s20, 0
      %p103 = por %p101, %p102
      %p104 = scmp.ne.s32.totalorder %s96, %s98
      %p105 = scmp.eq.s32.totalorder %s25, 5
      %p106 = por %p104, %p105
      %p107 = scmp.ne.s32.totalorder %s98, %s99
      %p108 = scmp.eq.s32.totalorder %s25, 0
      %p109 = por %p107, %p108
      %p110 = scmp.ne.s32.totalorder %s98, %s99
      %p111 = scmp.eq.s32.totalorder %s26, 5
      %p112 = por %p110, %p111
      %p114 = scmp.ne.s32.totalorder %s99, %s113
      %p115 = scmp.eq.s32.totalorder %s26, 0
      %p116 = por %p114, %p115
      %s118 = sadd.s32 %s117, 1
      %p121 = scmp.eq.s32.totalorder %s20, 5
      %p122 = scmp.ne.s32.totalorder %s117, %s119
      %p123 = scmp.eq.s32.totalorder %s20, 0
      %p124 = por %p122, %p123
      %p125 = scmp.ne.s32.totalorder %s117, %s119
      %p126 = scmp.eq.s32.totalorder %s25, 5
      %p127 = por %p125, %p126
      %p128 = scmp.ne.s32.totalorder %s119, %s120
      %p129 = scmp.eq.s32.totalorder %s25, 0
      %p130 = por %p128, %p129
      %p131 = scmp.ne.s32.totalorder %s119, %s120
      %p132 = scmp.eq.s32.totalorder %s26, 5
      %p133 = por %p131, %p132
      %p135 = scmp.ne.s32.totalorder %s120, %s134
      %p136 = scmp.eq.s32.totalorder %s26, 0
      %p137 = por %p135, %p136
      %s139 = sadd.s32 %s138, 1
      %p142 = scmp.eq.s32.totalorder %s20, 5
      %p143 = scmp.ne.s32.totalorder %s138, %s140
      %p144 = scmp.eq.s32.totalorder %s20, 0
      %p145 = por %p143, %p144
      %p146 = scmp.ne.s32.totalorder %s138, %s140
      %p147 = scmp.eq.s32.totalorder %s25, 5
      %p148 = por %p146, %p147
      %p149 = scmp.ne.s32.totalorder %s140, %s141
      %p150 = scmp.eq.s32.totalorder %s25, 0
      %p151 = por %p149, %p150
      %p152 = scmp.ne.s32.totalorder %s140, %s141
      %p153 = scmp.eq.s32.totalorder %s26, 5
      %p154 = por %p152, %p153
      %p156 = scmp.ne.s32.totalorder %s141, %s155
      %p157 = scmp.eq.s32.totalorder %s26, 0
      %p158 = por %p156, %p157
      %s160 = sadd.s32 %s159, 1
      %p163 = scmp.eq.s32.totalorder %s20, 5
      %p164 = scmp.ne.s32.totalorder %s159, %s161
      %p165 = scmp.eq.s32.totalorder %s20, 0
      %p166 = por %p164, %p165
      %p167 = scmp.ne.s32.totalorder %s159, %s161
      %p168 = scmp.eq.s32.totalorder %s25, 5
      %p169 = por %p167, %p168
      %p170 = scmp.ne.s32.totalorder %s161, %s162
      %p171 = scmp.eq.s32.totalorder %s25, 0
      %p172 = por %p170, %p171
      %p173 = scmp.ne.s32.totalorder %s161, %s162
      %p174 = scmp.eq.s32.totalorder %s26, 5
      %p175 = por %p173, %p174
      %p177 = scmp.ne.s32.totalorder %s162, %s176
      %p178 = scmp.eq.s32.totalorder %s26, 0
      %p179 = por %p177, %p178
      %s181 = sadd.s32 %s180, 1
      %p184 = scmp.eq.s32.totalorder %s20, 5
      %p185 = scmp.ne.s32.totalorder %s180, %s182
      %p186 = scmp.eq.s32.totalorder %s20, 0
      %p187 = por %p185, %p186
      %p188 = scmp.ne.s32.totalorder %s180, %s182
      %p189 = scmp.eq.s32.totalorder %s25, 5
      %p190 = por %p188, %p189
      %p191 = scmp.ne.s32.totalorder %s182, %s183
      %p192 = scmp.eq.s32.totalorder %s25, 0
      %p193 = por %p191, %p192
      %p194 = scmp.ne.s32.totalorder %s182, %s183
      %p195 = scmp.eq.s32.totalorder %s26, 5
      %p196 = por %p194, %p195
      %p198 = scmp.ne.s32.totalorder %s183, %s197
      %p199 = scmp.eq.s32.totalorder %s26, 0
      %p200 = por %p198, %p199
      %s202 = sadd.s32 %s201, 1
      %p205 = scmp.eq.s32.totalorder %s20, 5
      %p206 = scmp.ne.s32.totalorder %s201, %s203
      %p207 = scmp.eq.s32.totalorder %s20, 0
      %p208 = por %p206, %p207
      %p209 = scmp.ne.s32.totalorder %s201, %s203
      %p210 = scmp.eq.s32.totalorder %s25, 5
      %p211 = por %p209, %p210
      %p212 = scmp.ne.s32.totalorder %s203, %s204
      %p213 = scmp.eq.s32.totalorder %s25, 0
      %p214 = por %p212, %p213
      %p215 = scmp.ne.s32.totalorder %s203, %s204
      %p216 = scmp.eq.s32.totalorder %s26, 5
      %p217 = por %p215, %p216
      %p219 = scmp.ne.s32.totalorder %s204, %s218
      %p220 = scmp.eq.s32.totalorder %s26, 0
      %p221 = por %p219, %p220
      %s223 = sadd.s32 %s222, 1
      %p226 = scmp.eq.s32.totalorder %s20, 5
      %p227 = scmp.ne.s32.totalorder %s222, %s224
      %p228 = scmp.eq.s32.totalorder %s20, 0
      %p229 = por %p227, %p228
      %p230 = scmp.ne.s32.totalorder %s222, %s224
      %p231 = scmp.eq.s32.totalorder %s25, 5
      %p232 = por %p230, %p231
      %p233 = scmp.ne.s32.totalorder %s224, %s225
      %p234 = scmp.eq.s32.totalorder %s25, 0
      %p235 = por %p233, %p234
      %p236 = scmp.ne.s32.totalorder %s224, %s225
      %p237 = scmp.eq.s32.totalorder %s26, 5
      %p238 = por %p236, %p237
      %p240 = scmp.ne.s32.totalorder %s225, %s239
      %p241 = scmp.eq.s32.totalorder %s26, 0
      %p242 = por %p240, %p241
      %s244 = sadd.s32 %s243, 1
      %p247 = scmp.eq.s32.totalorder %s20, 5
      %p248 = scmp.ne.s32.totalorder %s243, %s245
      %p249 = scmp.eq.s32.totalorder %s20, 0
      %p250 = por %p248, %p249
      %p251 = scmp.ne.s32.totalorder %s243, %s245
      %p252 = scmp.eq.s32.totalorder %s25, 5
      %p253 = por %p251, %p252
      %p254 = scmp.ne.s32.totalorder %s245, %s246
      %p255 = scmp.eq.s32.totalorder %s25, 0
      %p256 = por %p254, %p255
      %p257 = scmp.ne.s32.totalorder %s245, %s246
      %p258 = scmp.eq.s32.totalorder %s26, 5
      %p259 = por %p257, %p258
      %p261 = scmp.ne.s32.totalorder %s246, %s260
      %p262 = scmp.eq.s32.totalorder %s26, 0
      %p263 = por %p261, %p262
      %s264 = ssub.s32 %s20, %s27
      %p265 = scmp.eq.s32.totalorder %s264, 0
      %s267 = sadd.s32 %s266, 1
      %s268 = scalar_select %p265, %s266, %s267
      %p271 = pneg %p265
      %p272 = scmp.eq.s32.totalorder %s20, 5
      %p273 = por %p271, %p272
      %p274 = scmp.ne.s32.totalorder %s266, %s269
      %p275 = scmp.eq.s32.totalorder %s20, 0
      %p276 = por %p274, %p275
      %p277 = scmp.ne.s32.totalorder %s266, %s269
      %p278 = scmp.eq.s32.totalorder %s25, 5
      %p279 = por %p277, %p278
      %p280 = scmp.ne.s32.totalorder %s269, %s270
      %p281 = scmp.eq.s32.totalorder %s25, 0
      %p282 = por %p280, %p281
      %p283 = scmp.ne.s32.totalorder %s269, %s270
      %p284 = scmp.eq.s32.totalorder %s26, 5
      %p285 = por %p283, %p284
      %p287 = scmp.ne.s32.totalorder %s270, %s286
      %p288 = scmp.eq.s32.totalorder %s26, 0
      %p289 = por %p287, %p288
      %p290 = scmp.le.s32.totalorder 1, %s20
      %p291 = scmp.lt.s32.totalorder %s20, 7
      %p292 = pnand %p290, %p291
      %p293 = pneg %p292
      // Predicated region
      $region9: #{_device_forward.2} parent=5 // pred_check
        _
      $region10: #{_device_forward.2} parent=5 // pred_check_branch
        %295 = sbr.rel (%p292) target = $region12
      $region11: #{_device_forward.2} parent=5 // pred_region
        %s296 = ssub.s32 %s20, 1
        // Predicated region
        $region13: #{_device_forward.2} parent=11 // pred_check
          %p297 = pneg %p67
        $region14: #{_device_forward.2} parent=11 // pred_check_branch
          %299 = sbr.rel (%p297) target = $region16
        $region15: #{_device_forward.2} parent=11 // pred_region
          _
        $region16: #{_device_forward.2} parent=11 // pred_fallthru
          _
        // Predicated region
        $region17: #{_device_forward.2} parent=11 // pred_check
          %p300 = pneg %p88
        $region18: #{_device_forward.2} parent=11 // pred_check_branch
          %302 = sbr.rel (%p300) target = $region20
        $region19: #{_device_forward.2} parent=11 // pred_region
          _
        $region20: #{_device_forward.2} parent=11 // pred_fallthru
          _
        // Predicated region
        $region21: #{_device_forward.2} parent=11 // pred_check
          %p303 = pneg %p109
        $region22: #{_device_forward.2} parent=11 // pred_check_branch
          %305 = sbr.rel (%p303) target = $region24
        $region23: #{_device_forward.2} parent=11 // pred_region
          _
        $region24: #{_device_forward.2} parent=11 // pred_fallthru
          _
        // Predicated region
        $region25: #{_device_forward.2} parent=11 // pred_check
          %p306 = pneg %p130
        $region26: #{_device_forward.2} parent=11 // pred_check_branch
          %308 = sbr.rel (%p306) target = $region28
        $region27: #{_device_forward.2} parent=11 // pred_region
          _
        $region28: #{_device_forward.2} parent=11 // pred_fallthru
          _
        // Predicated region
        $region29: #{_device_forward.2} parent=11 // pred_check
          %p309 = pneg %p151
        $region30: #{_device_forward.2} parent=11 // pred_check_branch
          %311 = sbr.rel (%p309) target = $region32
        $region31: #{_device_forward.2} parent=11 // pred_region
          _
        $region32: #{_device_forward.2} parent=11 // pred_fallthru
          _
        // Predicated region
        $region33: #{_device_forward.2} parent=11 // pred_check
          %p312 = pneg %p172
        $region34: #{_device_forward.2} parent=11 // pred_check_branch
          %314 = sbr.rel (%p312) target = $region36
        $region35: #{_device_forward.2} parent=11 // pred_region
          _
        $region36: #{_device_forward.2} parent=11 // pred_fallthru
          _
        // Predicated region
        $region37: #{_device_forward.2} parent=11 // pred_check
          %p315 = pneg %p193
        $region38: #{_device_forward.2} parent=11 // pred_check_branch
          %317 = sbr.rel (%p315) target = $region40
        $region39: #{_device_forward.2} parent=11 // pred_region
          _
        $region40: #{_device_forward.2} parent=11 // pred_fallthru
          _
        // Predicated region
        $region41: #{_device_forward.2} parent=11 // pred_check
          %p318 = pneg %p214
        $region42: #{_device_forward.2} parent=11 // pred_check_branch
          %320 = sbr.rel (%p318) target = $region44
        $region43: #{_device_forward.2} parent=11 // pred_region
          _
        $region44: #{_device_forward.2} parent=11 // pred_fallthru
          _
        // Predicated region
        $region45: #{_device_forward.2} parent=11 // pred_check
          %p321 = pneg %p235
        $region46: #{_device_forward.2} parent=11 // pred_check_branch
          %323 = sbr.rel (%p321) target = $region48
        $region47: #{_device_forward.2} parent=11 // pred_region
          _
        $region48: #{_device_forward.2} parent=11 // pred_fallthru
          _
        // Predicated region
        $region49: #{_device_forward.2} parent=11 // pred_check
          %p324 = pneg %p256
        $region50: #{_device_forward.2} parent=11 // pred_check_branch
          %326 = sbr.rel (%p324) target = $region52
        $region51: #{_device_forward.2} parent=11 // pred_region
          _
        $region52: #{_device_forward.2} parent=11 // pred_fallthru
          _
      $region12: #{_device_forward.2} parent=5 // pred_fallthru
        _
      %p327 = scmp.lt.s32.totalorder %s20, 6
      // Predicated region
      $region53: #{_device_forward.2} parent=5 // pred_check
        %p328 = pneg %p327
      $region54: #{_device_forward.2} parent=5 // pred_check_branch
        %330 = sbr.rel (%p328) target = $region56
      $region55: #{_device_forward.2} parent=5 // pred_region
        // Predicated region
        $region57: #{_device_forward.2} parent=55 // pred_check
          %p331 = pneg %p40
        $region58: #{_device_forward.2} parent=55 // pred_check_branch
          %333 = sbr.rel (%p331) target = $region60
        $region59: #{_device_forward.2} parent=55 // pred_region
          %s334 = sand.u32 %s30, 1
          %s335 = scalar_lea.sflag [#allocation3], %s334
          %s336 = sand.u32 %s30, 1
          %s337 = smul.addr %s336, 64
          %s338 = scalar_lea.vmem [#allocation2], %s337
          %s339 = smul.u32 16, %s20
          %s341 = ssub.s32 1024, 1024
          %342 = vsyncadd %s335, %s341
          %s343 = smul.addr %s339, 64
          %s344 = scalar_lea.hbm %s0, %s343
          %s345 = sshll.u32 %s338, 4
          %s346 = int_to_ptr.vmem [resolvable:$true] %s345
          %351 = dma.hbm_to_vmem [thread:$0]  %s344, 1024, %s346, %s335, 64, 64, 4
        $region60: #{_device_forward.2} parent=55 // pred_fallthru
          _
      $region56: #{_device_forward.2} parent=5 // pred_fallthru
        _
      %p352 = scmp.le.s32.totalorder 1, %s20
      %p353 = scmp.lt.s32.totalorder %s20, 7
      %p354 = pnand %p352, %p353
      %p355 = pneg %p354
      // Predicated region
      $region61: #{_device_forward.2} parent=5 // pred_check
        _
      $region62: #{_device_forward.2} parent=5 // pred_check_branch
        %357 = sbr.rel (%p354) target = $region64
      $region63: #{_device_forward.2} parent=5 // pred_region
        %s358 = ssub.s32 %s20, 1
        %s359 = sand.u32 %s33, 1
        %s360 = scalar_lea.sflag [#allocation3], %s359
        %s361 = sand.u32 %s33, 1
        %s362 = smul.addr %s361, 64
        %s363 = scalar_lea.vmem [#allocation2], %s362
        // Predicated region
        $region65: #{_device_forward.2} parent=63 // pred_check
          %p364 = pneg %p46
        $region66: #{_device_forward.2} parent=63 // pred_check_branch
          %366 = sbr.rel (%p364) target = $region68
        $region67: #{_device_forward.2} parent=63 // pred_region
          %367 = dma.done %s360, 1024
        $region68: #{_device_forward.2} parent=63 // pred_fallthru
          _
        %s368 = sand.u32 %s33, 1
        %s369 = scalar_lea.sflag [#allocation3], %s368
        %s370 = sand.u32 %s33, 1
        %s371 = smul.addr %s370, 64
        %s372 = scalar_lea.vmem [#allocation2], %s371
        %p373 = pneg %p46
        %p374 = pneg %p43
        %p375 = pneg %p67
        %p376 = pneg %p64
        %p377 = pneg %p88
        %p378 = pneg %p85
        %p379 = pneg %p109
        %p380 = pneg %p106
        %p381 = pneg %p130
        %p382 = pneg %p127
        %p383 = pneg %p151
        %p384 = pneg %p148
        %p385 = pneg %p172
        %p386 = pneg %p169
        %p387 = pneg %p193
        %p388 = pneg %p190
        %p389 = pneg %p214
        %p390 = pneg %p211
        %p391 = pneg %p235
        %p392 = pneg %p232
        %p393 = pneg %p256
        %p394 = pneg %p253
        %p395 = pneg %p282
        %p396 = pneg %p279
        %p397 = scmp.lt.s32.totalorder %s25, 5
        %s398 = scalar_select %p397, %s25, 5
        %s399 = smul.addr %s398, 2
        %s400 = scalar_lea.vmem %s11, %s399
        %s401 = smul.u32 16, %s25
        %p402 = scmp.lt.s32.totalorder %s25, 5
        %s403 = scalar_select %p402, %s25, 5
        %s404 = smul.addr %s403, 2
        %s405 = scalar_lea.vmem %s11, %s404
        %v407 = vlaneseq
        %v408 = vshrl.u32 %v407, 7
        %v409 = vadd.s32 %v408, 8
        %v410 = vadd.s32 %v408, 16
        %v411 = vadd.s32 %v408, 24
        %v412 = vadd.s32 %v408, 32
        %v413 = vadd.s32 %v408, 40
        %v414 = vadd.s32 %v408, 48
        %v415 = vadd.s32 %v408, 56
        %v416 = vadd.s32 %v408, 64
        %v417 = vadd.s32 %v408, 72
        %v418 = vadd.s32 %v408, 80
        %v419 = vadd.s32 %v408, 88
        %v420 = vadd.s32 %v408, 96
        %v421 = vadd.s32 %v408, 104
        %v422 = vadd.s32 %v408, 112
        %v423 = vadd.s32 %v408, 120
        %vm424 = vcmp.lt.s32.totalorder %v408, 0
        %v425 = vsub.s32 0, %v408
        %v426 = vsel %vm424, %v425, %v408
        %v427 = vshrl.u32 %v426, 6
        %v428 = vand.u32 %v426, 63
        %v429 = vsub.s32 0, %v428
        %v430 = vsel %vm424, %v429, %v428
        %vm431 = vcmp.lt.s32.totalorder %v409, 0
        %v432 = vsub.s32 0, %v409
        %v433 = vsel %vm431, %v432, %v409
        %v434 = vshrl.u32 %v433, 6
        %v435 = vand.u32 %v433, 63
        %v436 = vsub.s32 0, %v435
        %v437 = vsel %vm431, %v436, %v435
        %vm438 = vcmp.lt.s32.totalorder %v410, 0
        %v439 = vsub.s32 0, %v410
        %v440 = vsel %vm438, %v439, %v410
        %v441 = vshrl.u32 %v440, 6
        %v442 = vand.u32 %v440, 63
        %v443 = vsub.s32 0, %v442
        %v444 = vsel %vm438, %v443, %v442
        %vm445 = vcmp.lt.s32.totalorder %v411, 0
        %v446 = vsub.s32 0, %v411
        %v447 = vsel %vm445, %v446, %v411
        %v448 = vshrl.u32 %v447, 6
        %v449 = vand.u32 %v447, 63
        %v450 = vsub.s32 0, %v449
        %v451 = vsel %vm445, %v450, %v449
        %vm452 = vcmp.lt.s32.totalorder %v412, 0
        %v453 = vsub.s32 0, %v412
        %v454 = vsel %vm452, %v453, %v412
        %v455 = vshrl.u32 %v454, 6
        %v456 = vand.u32 %v454, 63
        %v457 = vsub.s32 0, %v456
        %v458 = vsel %vm452, %v457, %v456
        %vm459 = vcmp.lt.s32.totalorder %v413, 0
        %v460 = vsub.s32 0, %v413
        %v461 = vsel %vm459, %v460, %v413
        %v462 = vshrl.u32 %v461, 6
        %v463 = vand.u32 %v461, 63
        %v464 = vsub.s32 0, %v463
        %v465 = vsel %vm459, %v464, %v463
        %vm466 = vcmp.lt.s32.totalorder %v414, 0
        %v467 = vsub.s32 0, %v414
        %v468 = vsel %vm466, %v467, %v414
        %v469 = vshrl.u32 %v468, 6
        %v470 = vand.u32 %v468, 63
        %v471 = vsub.s32 0, %v470
        %v472 = vsel %vm466, %v471, %v470
        %vm473 = vcmp.lt.s32.totalorder %v415, 0
        %v474 = vsub.s32 0, %v415
        %v475 = vsel %vm473, %v474, %v415
        %v476 = vshrl.u32 %v475, 6
        %v477 = vand.u32 %v475, 63
        %v478 = vsub.s32 0, %v477
        %v479 = vsel %vm473, %v478, %v477
        %vm480 = vcmp.lt.s32.totalorder %v416, 0
        %v481 = vsub.s32 0, %v416
        %v482 = vsel %vm480, %v481, %v416
        %v483 = vshrl.u32 %v482, 6
        %v484 = vand.u32 %v482, 63
        %v485 = vsub.s32 0, %v484
        %v486 = vsel %vm480, %v485, %v484
        %vm487 = vcmp.lt.s32.totalorder %v417, 0
        %v488 = vsub.s32 0, %v417
        %v489 = vsel %vm487, %v488, %v417
        %v490 = vshrl.u32 %v489, 6
        %v491 = vand.u32 %v489, 63
        %v492 = vsub.s32 0, %v491
        %v493 = vsel %vm487, %v492, %v491
        %vm494 = vcmp.lt.s32.totalorder %v418, 0
        %v495 = vsub.s32 0, %v418
        %v496 = vsel %vm494, %v495, %v418
        %v497 = vshrl.u32 %v496, 6
        %v498 = vand.u32 %v496, 63
        %v499 = vsub.s32 0, %v498
        %v500 = vsel %vm494, %v499, %v498
        %vm501 = vcmp.lt.s32.totalorder %v419, 0
        %v502 = vsub.s32 0, %v419
        %v503 = vsel %vm501, %v502, %v419
        %v504 = vshrl.u32 %v503, 6
        %v505 = vand.u32 %v503, 63
        %v506 = vsub.s32 0, %v505
        %v507 = vsel %vm501, %v506, %v505
        %vm508 = vcmp.lt.s32.totalorder %v420, 0
        %v509 = vsub.s32 0, %v420
        %v510 = vsel %vm508, %v509, %v420
        %v511 = vshrl.u32 %v510, 6
        %v512 = vand.u32 %v510, 63
        %v513 = vsub.s32 0, %v512
        %v514 = vsel %vm508, %v513, %v512
        %vm515 = vcmp.lt.s32.totalorder %v421, 0
        %v516 = vsub.s32 0, %v421
        %v517 = vsel %vm515, %v516, %v421
        %v518 = vshrl.u32 %v517, 6
        %v519 = vand.u32 %v517, 63
        %v520 = vsub.s32 0, %v519
        %v521 = vsel %vm515, %v520, %v519
        %vm522 = vcmp.lt.s32.totalorder %v422, 0
        %v523 = vsub.s32 0, %v422
        %v524 = vsel %vm522, %v523, %v422
        %v525 = vshrl.u32 %v524, 6
        %v526 = vand.u32 %v524, 63
        %v527 = vsub.s32 0, %v526
        %v528 = vsel %vm522, %v527, %v526
        %vm529 = vcmp.lt.s32.totalorder %v423, 0
        %v530 = vsub.s32 0, %v423
        %v531 = vsel %vm529, %v530, %v423
        %v532 = vshrl.u32 %v531, 6
        %v533 = vand.u32 %v531, 63
        %v534 = vsub.s32 0, %v533
        %v535 = vsel %vm529, %v534, %v533
        %vm536 = vcmp.ne.s32.totalorder %v430, 0
        %vm537 = vcmp.ne.s32.totalorder %v437, 0
        %vm538 = vcmp.ne.s32.totalorder %v444, 0
        %vm539 = vcmp.ne.s32.totalorder %v451, 0
        %vm540 = vcmp.ne.s32.totalorder %v458, 0
        %vm541 = vcmp.ne.s32.totalorder %v465, 0
        %vm542 = vcmp.ne.s32.totalorder %v472, 0
        %vm543 = vcmp.ne.s32.totalorder %v479, 0
        %vm544 = vcmp.ne.s32.totalorder %v486, 0
        %vm545 = vcmp.ne.s32.totalorder %v493, 0
        %vm546 = vcmp.ne.s32.totalorder %v500, 0
        %vm547 = vcmp.ne.s32.totalorder %v507, 0
        %vm548 = vcmp.ne.s32.totalorder %v514, 0
        %vm549 = vcmp.ne.s32.totalorder %v521, 0
        %vm550 = vcmp.ne.s32.totalorder %v528, 0
        %vm551 = vcmp.ne.s32.totalorder %v535, 0
        %vm552 = vcmp.lt.s32.totalorder %v430, 0
        %vm553 = vcmp.lt.s32.totalorder %v437, 0
        %vm554 = vcmp.lt.s32.totalorder %v444, 0
        %vm555 = vcmp.lt.s32.totalorder %v451, 0
        %vm556 = vcmp.lt.s32.totalorder %v458, 0
        %vm557 = vcmp.lt.s32.totalorder %v465, 0
        %vm558 = vcmp.lt.s32.totalorder %v472, 0
        %vm559 = vcmp.lt.s32.totalorder %v479, 0
        %vm560 = vcmp.lt.s32.totalorder %v486, 0
        %vm561 = vcmp.lt.s32.totalorder %v493, 0
        %vm562 = vcmp.lt.s32.totalorder %v500, 0
        %vm563 = vcmp.lt.s32.totalorder %v507, 0
        %vm564 = vcmp.lt.s32.totalorder %v514, 0
        %vm565 = vcmp.lt.s32.totalorder %v521, 0
        %vm566 = vcmp.lt.s32.totalorder %v528, 0
        %vm567 = vcmp.lt.s32.totalorder %v535, 0
        %vm568 = vmand %vm552, %vm536
        %vm569 = vmand %vm553, %vm537
        %vm570 = vmand %vm554, %vm538
        %vm571 = vmand %vm555, %vm539
        %vm572 = vmand %vm556, %vm540
        %vm573 = vmand %vm557, %vm541
        %vm574 = vmand %vm558, %vm542
        %vm575 = vmand %vm559, %vm543
        %vm576 = vmand %vm560, %vm544
        %vm577 = vmand %vm561, %vm545
        %vm578 = vmand %vm562, %vm546
        %vm579 = vmand %vm563, %vm547
        %vm580 = vmand %vm564, %vm548
        %vm581 = vmand %vm565, %vm549
        %vm582 = vmand %vm566, %vm550
        %vm583 = vmand %vm567, %vm551
        %v584 = vadd.s32 %v430, 64
        %v585 = vadd.s32 %v437, 64
        %v586 = vadd.s32 %v444, 64
        %v587 = vadd.s32 %v451, 64
        %v588 = vadd.s32 %v458, 64
        %v589 = vadd.s32 %v465, 64
        %v590 = vadd.s32 %v472, 64
        %v591 = vadd.s32 %v479, 64
        %v592 = vadd.s32 %v486, 64
        %v593 = vadd.s32 %v493, 64
        %v594 = vadd.s32 %v500, 64
        %v595 = vadd.s32 %v507, 64
        %v596 = vadd.s32 %v514, 64
        %v597 = vadd.s32 %v521, 64
        %v598 = vadd.s32 %v528, 64
        %v599 = vadd.s32 %v535, 64
        %v600 = vsel %vm568, %v584, %v430
        %v601 = vsel %vm569, %v585, %v437
        %v602 = vsel %vm570, %v586, %v444
        %v603 = vsel %vm571, %v587, %v451
        %v604 = vsel %vm572, %v588, %v458
        %v605 = vsel %vm573, %v589, %v465
        %v606 = vsel %vm574, %v590, %v472
        %v607 = vsel %vm575, %v591, %v479
        %v608 = vsel %vm576, %v592, %v486
        %v609 = vsel %vm577, %v593, %v493
        %v610 = vsel %vm578, %v594, %v500
        %v611 = vsel %vm579, %v595, %v507
        %v612 = vsel %vm580, %v596, %v514
        %v613 = vsel %vm581, %v597, %v521
        %v614 = vsel %vm582, %v598, %v528
        %v615 = vsel %vm583, %v599, %v535
        %vm616 = vcmp.lt.s32.totalorder %v600, 11
        %vm617 = vcmp.lt.s32.totalorder %v601, 11
        %vm618 = vcmp.lt.s32.totalorder %v602, 11
        %vm619 = vcmp.lt.s32.totalorder %v603, 11
        %vm620 = vcmp.lt.s32.totalorder %v604, 11
        %vm621 = vcmp.lt.s32.totalorder %v605, 11
        %vm622 = vcmp.lt.s32.totalorder %v606, 11
        %vm623 = vcmp.lt.s32.totalorder %v607, 11
        %vm624 = vcmp.lt.s32.totalorder %v608, 11
        %vm625 = vcmp.lt.s32.totalorder %v609, 11
        %vm626 = vcmp.lt.s32.totalorder %v610, 11
        %vm627 = vcmp.lt.s32.totalorder %v611, 11
        %vm628 = vcmp.lt.s32.totalorder %v612, 11
        %vm629 = vcmp.lt.s32.totalorder %v613, 11
        %vm630 = vcmp.lt.s32.totalorder %v614, 11
        %vm631 = vcmp.lt.s32.totalorder %v615, 11
        %v632 = vsel %vm616, 1, 0
        %v633 = vsel %vm617, 1, 0
        %v634 = vsel %vm618, 1, 0
        %v635 = vsel %vm619, 1, 0
        %v636 = vsel %vm620, 1, 0
        %v637 = vsel %vm621, 1, 0
        %v638 = vsel %vm622, 1, 0
        %v639 = vsel %vm623, 1, 0
        %v640 = vsel %vm624, 1, 0
        %v641 = vsel %vm625, 1, 0
        %v642 = vsel %vm626, 1, 0
        %v643 = vsel %vm627, 1, 0
        %v644 = vsel %vm628, 1, 0
        %v645 = vsel %vm629, 1, 0
        %v646 = vsel %vm630, 1, 0
        %v647 = vsel %vm631, 1, 0
        %v648 = vcvt.s32.f32 %v632
        %v649 = vcvt.s32.f32 %v633
        %v650 = vcvt.s32.f32 %v634
        %v651 = vcvt.s32.f32 %v635
        %v652 = vcvt.s32.f32 %v636
        %v653 = vcvt.s32.f32 %v637
        %v654 = vcvt.s32.f32 %v638
        %v655 = vcvt.s32.f32 %v639
        %v656 = vcvt.s32.f32 %v640
        %v657 = vcvt.s32.f32 %v641
        %v658 = vcvt.s32.f32 %v642
        %v659 = vcvt.s32.f32 %v643
        %v660 = vcvt.s32.f32 %v644
        %v661 = vcvt.s32.f32 %v645
        %v662 = vcvt.s32.f32 %v646
        %v663 = vcvt.s32.f32 %v647
        %v664 = vld [vmem:[%s363] sm:$0xf]
        %v665 = vld [vmem:[%s363 + $0x4] sm:$0xf]
        %v666 = vld [vmem:[%s363 + $0x8] sm:$0xf]
        %v667 = vld [vmem:[%s363 + $0xc] sm:$0xf]
        %v668 = vld [vmem:[%s363 + $0x10] sm:$0xf]
        %v669 = vld [vmem:[%s363 + $0x14] sm:$0xf]
        %v670 = vld [vmem:[%s363 + $0x18] sm:$0xf]
        %v671 = vld [vmem:[%s363 + $0x1c] sm:$0xf]
        %v672 = vld [vmem:[%s363 + $0x20] sm:$0xf]
        %v673 = vld [vmem:[%s363 + $0x24] sm:$0xf]
        %v674 = vld [vmem:[%s363 + $0x28] sm:$0xf]
        %v675 = vld [vmem:[%s363 + $0x2c] sm:$0xf]
        %v676 = vld [vmem:[%s363 + $0x30] sm:$0xf]
        %v677 = vld [vmem:[%s363 + $0x34] sm:$0xf]
        %v678 = vld [vmem:[%s363 + $0x38] sm:$0xf]
        %v679 = vld [vmem:[%s363 + $0x3c] sm:$0xf]
        %v680 = vld [vmem:[%s1] sm:$0xf]
        %v681 = vld [vmem:[%s1 + $0x4] sm:$0xf]
        %v682 = vld [vmem:[%s1 + $0x8] sm:$0xf]
        %v683 = vld [vmem:[%s1 + $0xc] sm:$0xf]
        %v684 = vld [vmem:[%s1 + $0x10] sm:$0xf]
        %v685 = vld [vmem:[%s1 + $0x14] sm:$0xf]
        %v686 = vld [vmem:[%s1 + $0x18] sm:$0xf]
        %v687 = vld [vmem:[%s1 + $0x1c] sm:$0xf]
        %v688 = vld [vmem:[%s1 + $0x20] sm:$0xf]
        %v689 = vld [vmem:[%s1 + $0x24] sm:$0xf]
        %v690 = vld [vmem:[%s1 + $0x28] sm:$0xf]
        %v691 = vld [vmem:[%s1 + $0x2c] sm:$0xf]
        %v692 = vld [vmem:[%s1 + $0x30] sm:$0xf]
        %v693 = vld [vmem:[%s1 + $0x34] sm:$0xf]
        %v694 = vld [vmem:[%s1 + $0x38] sm:$0xf]
        %v695 = vld [vmem:[%s1 + $0x3c] sm:$0xf]
        %v696 = vld [vmem:[%s2] sm:$0x1]
        %v698 = vlaneseq
        %v699 = vshrl.u32 %v698, 7
        %v700 = vsub.s32 0, %v699
        %v701 = vrot.slane %v696, %v700
        %v719 = vunpack.c.l.b16 %v664
        %v720 = vunpack.c.l.b16 %v665
        %v721 = vunpack.c.l.b16 %v666
        %v722 = vunpack.c.l.b16 %v667
        %v723 = vunpack.c.l.b16 %v668
        %v724 = vunpack.c.l.b16 %v669
        %v725 = vunpack.c.l.b16 %v670
        %v726 = vunpack.c.l.b16 %v671
        %v727 = vunpack.c.l.b16 %v672
        %v728 = vunpack.c.l.b16 %v673
        %v729 = vunpack.c.l.b16 %v674
        %v730 = vunpack.c.l.b16 %v675
        %v731 = vunpack.c.l.b16 %v676
        %v732 = vunpack.c.l.b16 %v677
        %v733 = vunpack.c.l.b16 %v678
        %v734 = vunpack.c.l.b16 %v679
        %v735 = vpack.c.b16 %v720, %v719
        %v736 = vpack.c.b16 %v722, %v721
        %v737 = vpack.c.b16 %v724, %v723
        %v738 = vpack.c.b16 %v726, %v725
        %v739 = vpack.c.b16 %v728, %v727
        %v740 = vpack.c.b16 %v730, %v729
        %v741 = vpack.c.b16 %v732, %v731
        %v742 = vpack.c.b16 %v734, %v733
        %v767 = vunpack.c.l.b16 %v680
        %v768 = vunpack.c.l.b16 %v681
        %v769 = vunpack.c.l.b16 %v682
        %v770 = vunpack.c.l.b16 %v683
        %v771 = vunpack.c.l.b16 %v684
        %v772 = vunpack.c.l.b16 %v685
        %v773 = vunpack.c.l.b16 %v686
        %v774 = vunpack.c.l.b16 %v687
        %v775 = vunpack.c.l.b16 %v688
        %v776 = vunpack.c.l.b16 %v689
        %v777 = vunpack.c.l.b16 %v690
        %v778 = vunpack.c.l.b16 %v691
        %v779 = vunpack.c.l.b16 %v692
        %v780 = vunpack.c.l.b16 %v693
        %v781 = vunpack.c.l.b16 %v694
        %v782 = vunpack.c.l.b16 %v695
        %v783 = vpack.c.b16 %v768, %v767
        %v784 = vpack.c.b16 %v770, %v769
        %v785 = vpack.c.b16 %v772, %v771
        %v786 = vpack.c.b16 %v774, %v773
        %v787 = vpack.c.b16 %v776, %v775
        %v788 = vpack.c.b16 %v778, %v777
        %v789 = vpack.c.b16 %v780, %v779
        %v790 = vpack.c.b16 %v782, %v781
        %799 = vmatprep.subr.bf16.mxu0 0
        %800 = vmatpush1.bf16.msra.mxu0 %v790
        %801 = vmatprep.subr.bf16.mxu0 0
        %802 = vmatpush1.bf16.msra.mxu0 %v789
        %803 = vmatprep.subr.bf16.mxu0 0
        %804 = vmatpush1.bf16.msra.mxu0 %v788
        %805 = vmatprep.subr.bf16.mxu0 0
        %806 = vmatpush1.bf16.msra.mxu0 %v787
        %807 = vmatprep.subr.bf16.mxu0 0
        %808 = vmatpush1.bf16.msra.mxu0 %v786
        %809 = vmatprep.subr.bf16.mxu0 0
        %810 = vmatpush1.bf16.msra.mxu0 %v785
        %811 = vmatprep.subr.bf16.mxu0 0
        %812 = vmatpush1.bf16.msra.mxu0 %v784
        %813 = vmatprep.subr.bf16.mxu0 0
        %814 = vmatpush1.bf16.msra.mxu0 %v783
        %815 = vmatprep.subr.bf16.mxu0 0
        %816 = vmatpush2.bf16.msra.mxu0 0
        %817 = vmatprep.subr.bf16.mxu0 0
        %818 = vmatpush2.bf16.msra.mxu0 0
        %819 = vmatprep.subr.bf16.mxu0 0
        %820 = vmatpush2.bf16.msra.mxu0 0
        %821 = vmatprep.subr.bf16.mxu0 0
        %822 = vmatpush2.bf16.msra.mxu0 0
        %823 = vmatprep.subr.bf16.mxu0 0
        %824 = vmatpush2.bf16.msra.mxu0 0
        %825 = vmatprep.subr.bf16.mxu0 0
        %826 = vmatpush2.bf16.msra.mxu0 0
        %827 = vmatprep.subr.bf16.mxu0 0
        %828 = vmatpush2.bf16.msra.mxu0 0
        %829 = vmatprep.subr.bf16.mxu0 0
        %830 = vmatpush2.bf16.msra.mxu0 0
        %831 = vmatprep.mubr.bf16.mxu0 0
        %832 = vmatmul.mubr.bf16.gmra.mxu0 %v735
        %v833 = vpop.f32.mrf.mxu0
        %v834 = vadd.f32 %v701, %v833
        %v835 = vpop.f32.mrf.mxu0
        %v836 = vpop.f32.mrf.mxu0
        %v837 = vadd.f32 %v701, %v836
        %v838 = vpop.f32.mrf.mxu0
        %839 = vmatprep.mubr.bf16.mxu0 0
        %840 = vmatmul.mubr.bf16.gmra.mxu0 %v736
        %v841 = vpop.f32.mrf.mxu0
        %v842 = vadd.f32 %v701, %v841
        %v843 = vpop.f32.mrf.mxu0
        %v844 = vpop.f32.mrf.mxu0
        %v845 = vadd.f32 %v701, %v844
        %v846 = vpop.f32.mrf.mxu0
        %847 = vmatprep.mubr.bf16.mxu0 0
        %848 = vmatmul.mubr.bf16.gmra.mxu0 %v737
        %v849 = vpop.f32.mrf.mxu0
        %v850 = vadd.f32 %v701, %v849
        %v851 = vpop.f32.mrf.mxu0
        %v852 = vpop.f32.mrf.mxu0
        %v853 = vadd.f32 %v701, %v852
        %v854 = vpop.f32.mrf.mxu0
        %855 = vmatprep.mubr.bf16.mxu0 0
        %856 = vmatmul.mubr.bf16.gmra.mxu0 %v738
        %v857 = vpop.f32.mrf.mxu0
        %v858 = vadd.f32 %v701, %v857
        %v859 = vpop.f32.mrf.mxu0
        %v860 = vpop.f32.mrf.mxu0
        %v861 = vadd.f32 %v701, %v860
        %v862 = vpop.f32.mrf.mxu0
        %863 = vmatprep.mubr.bf16.mxu0 0
        %864 = vmatmul.mubr.bf16.gmra.mxu0 %v739
        %v865 = vpop.f32.mrf.mxu0
        %v866 = vadd.f32 %v701, %v865
        %v867 = vpop.f32.mrf.mxu0
        %v868 = vpop.f32.mrf.mxu0
        %v869 = vadd.f32 %v701, %v868
        %v870 = vpop.f32.mrf.mxu0
        %871 = vmatprep.mubr.bf16.mxu0 0
        %872 = vmatmul.mubr.bf16.gmra.mxu0 %v740
        %v873 = vpop.f32.mrf.mxu0
        %v874 = vadd.f32 %v701, %v873
        %v875 = vpop.f32.mrf.mxu0
        %v876 = vpop.f32.mrf.mxu0
        %v877 = vadd.f32 %v701, %v876
        %v878 = vpop.f32.mrf.mxu0
        %879 = vmatprep.mubr.bf16.mxu0 0
        %880 = vmatmul.mubr.bf16.gmra.mxu0 %v741
        %v881 = vpop.f32.mrf.mxu0
        %v882 = vadd.f32 %v701, %v881
        %v883 = vpop.f32.mrf.mxu0
        %v884 = vpop.f32.mrf.mxu0
        %v885 = vadd.f32 %v701, %v884
        %v886 = vpop.f32.mrf.mxu0
        %887 = vmatprep.mubr.bf16.mxu0 0
        %888 = vmatmul.mubr.bf16.gmra.mxu0 %v742
        %v889 = vpop.f32.mrf.mxu0
        %v890 = vadd.f32 %v701, %v889
        %v891 = vpop.f32.mrf.mxu0
        %v892 = vpop.f32.mrf.mxu0
        %v893 = vadd.f32 %v701, %v892
        %v894 = vpop.f32.mrf.mxu0
        %895 = vdwg.mxu0
        %v896 = vmax.f32 %v834, 0.0
        %v897 = vmax.f32 %v837, 0.0
        %v898 = vmax.f32 %v842, 0.0
        %v899 = vmax.f32 %v845, 0.0
        %v900 = vmax.f32 %v850, 0.0
        %v901 = vmax.f32 %v853, 0.0
        %v902 = vmax.f32 %v858, 0.0
        %v903 = vmax.f32 %v861, 0.0
        %v904 = vmax.f32 %v866, 0.0
        %v905 = vmax.f32 %v869, 0.0
        %v906 = vmax.f32 %v874, 0.0
        %v907 = vmax.f32 %v877, 0.0
        %v908 = vmax.f32 %v882, 0.0
        %v909 = vmax.f32 %v885, 0.0
        %v910 = vmax.f32 %v890, 0.0
        %v911 = vmax.f32 %v893, 0.0
        %v912 = vpack.c.bf16 %v897, %v896
        %v913 = vpack.c.bf16 %v899, %v898
        %v914 = vpack.c.bf16 %v901, %v900
        %v915 = vpack.c.bf16 %v903, %v902
        %v916 = vpack.c.bf16 %v905, %v904
        %v917 = vpack.c.bf16 %v907, %v906
        %v918 = vpack.c.bf16 %v909, %v908
        %v919 = vpack.c.bf16 %v911, %v910
        %v920 = vld [vmem:[%s3] sm:$0xff]
        %v921 = vld [vmem:[%s3 + $0x8] sm:$0xff]
        %v922 = vld [vmem:[%s3 + $0x10] sm:$0xff]
        %v923 = vld [vmem:[%s3 + $0x18] sm:$0xff]
        %v924 = vld [vmem:[%s4] sm:$0x3]
        %v926 = vlaneseq
        %v927 = vshrl.u32 %v926, 7
        %v928 = vsub.s32 0, %v927
        %v929 = vrot.slane %v924, %v928
        %v930 = vlaneseq
        %v931 = vshrl.u32 %v930, 7
        %v932 = vsub.s32 1, %v931
        %v933 = vrot.slane %v924, %v932
        %v940 = vunpack.c.l.b16 %v920
        %v941 = vunpack.c.h.b16 %v920
        %v942 = vunpack.c.l.b16 %v921
        %v943 = vunpack.c.h.b16 %v921
        %v944 = vunpack.c.l.b16 %v922
        %v945 = vunpack.c.h.b16 %v922
        %v946 = vunpack.c.l.b16 %v923
        %v947 = vunpack.c.h.b16 %v923
        %v948 = vpack.c.b16 %v942, %v940
        %v949 = vpack.c.b16 %v943, %v941
        %v950 = vpack.c.b16 %v946, %v944
        %v951 = vpack.c.b16 %v947, %v945
        %vm956 = vcmask 261120
        %v958 = vsel %vm956, %v912, 0
        %v961 = vsel %vm956, %v913, 0
        %v964 = vsel %vm956, %v914, 0
        %v967 = vsel %vm956, %v915, 0
        %v970 = vsel %vm956, %v916, 0
        %v973 = vsel %vm956, %v917, 0
        %v976 = vsel %vm956, %v918, 0
        %v979 = vsel %vm956, %v919, 0
        %981 = vmatprep.subr.bf16.mxu0 0
        %982 = vmatpush1.bf16.msra.mxu0 0
        %983 = vmatprep.subr.bf16.mxu0 0
        %984 = vmatpush1.bf16.msra.mxu0 0
        %985 = vmatprep.subr.bf16.mxu0 0
        %986 = vmatpush1.bf16.msra.mxu0 0
        %987 = vmatprep.subr.bf16.mxu0 0
        %988 = vmatpush1.bf16.msra.mxu0 0
        %989 = vmatprep.subr.bf16.mxu0 0
        %990 = vmatpush1.bf16.msra.mxu0 0
        %991 = vmatprep.subr.bf16.mxu0 0
        %992 = vmatpush1.bf16.msra.mxu0 0
        %993 = vmatprep.subr.bf16.mxu0 %v951
        %994 = vmatpush1.bf16.msra.mxu0 %v950
        %995 = vmatprep.subr.bf16.mxu0 %v949
        %996 = vmatpush1.bf16.msra.mxu0 %v948
        %997 = vmatprep.subr.bf16.mxu0 0
        %998 = vmatpush2.bf16.msra.mxu0 0
        %999 = vmatprep.subr.bf16.mxu0 0
        %1000 = vmatpush2.bf16.msra.mxu0 0
        %1001 = vmatprep.subr.bf16.mxu0 0
        %1002 = vmatpush2.bf16.msra.mxu0 0
        %1003 = vmatprep.subr.bf16.mxu0 0
        %1004 = vmatpush2.bf16.msra.mxu0 0
        %1005 = vmatprep.subr.bf16.mxu0 0
        %1006 = vmatpush2.bf16.msra.mxu0 0
        %1007 = vmatprep.subr.bf16.mxu0 0
        %1008 = vmatpush2.bf16.msra.mxu0 0
        %1009 = vmatprep.subr.bf16.mxu0 0
        %1010 = vmatpush2.bf16.msra.mxu0 0
        %1011 = vmatprep.subr.bf16.mxu0 0
        %1012 = vmatpush2.bf16.msra.mxu0 0
        %1013 = vmatprep.mubr.bf16.mxu0 0
        %1014 = vmatmul.mubr.bf16.gmra.mxu0 %v958
        %v1015 = vpop.f32.mrf.mxu0
        %v1016 = vadd.f32 %v929, %v1015
        %v1017 = vpop.f32.mrf.mxu0
        %v1018 = vadd.f32 %v933, %v1017
        %v1019 = vpop.f32.mrf.mxu0
        %v1020 = vadd.f32 %v929, %v1019
        %v1021 = vpop.f32.mrf.mxu0
        %v1022 = vadd.f32 %v933, %v1021
        %1023 = vmatprep.mubr.bf16.mxu0 0
        %1024 = vmatmul.mubr.bf16.gmra.mxu0 %v961
        %v1025 = vpop.f32.mrf.mxu0
        %v1026 = vadd.f32 %v929, %v1025
        %v1027 = vpop.f32.mrf.mxu0
        %v1028 = vadd.f32 %v933, %v1027
        %v1029 = vpop.f32.mrf.mxu0
        %v1030 = vadd.f32 %v929, %v1029
        %v1031 = vpop.f32.mrf.mxu0
        %v1032 = vadd.f32 %v933, %v1031
        %1033 = vmatprep.mubr.bf16.mxu0 0
        %1034 = vmatmul.mubr.bf16.gmra.mxu0 %v964
        %v1035 = vpop.f32.mrf.mxu0
        %v1036 = vadd.f32 %v929, %v1035
        %v1037 = vpop.f32.mrf.mxu0
        %v1038 = vadd.f32 %v933, %v1037
        %v1039 = vpop.f32.mrf.mxu0
        %v1040 = vadd.f32 %v929, %v1039
        %v1041 = vpop.f32.mrf.mxu0
        %v1042 = vadd.f32 %v933, %v1041
        %1043 = vmatprep.mubr.bf16.mxu0 0
        %1044 = vmatmul.mubr.bf16.gmra.mxu0 %v967
        %v1045 = vpop.f32.mrf.mxu0
        %v1046 = vadd.f32 %v929, %v1045
        %v1047 = vpop.f32.mrf.mxu0
        %v1048 = vadd.f32 %v933, %v1047
        %v1049 = vpop.f32.mrf.mxu0
        %v1050 = vadd.f32 %v929, %v1049
        %v1051 = vpop.f32.mrf.mxu0
        %v1052 = vadd.f32 %v933, %v1051
        %1053 = vmatprep.mubr.bf16.mxu0 0
        %1054 = vmatmul.mubr.bf16.gmra.mxu0 %v970
        %v1055 = vpop.f32.mrf.mxu0
        %v1056 = vadd.f32 %v929, %v1055
        %v1057 = vpop.f32.mrf.mxu0
        %v1058 = vadd.f32 %v933, %v1057
        %v1059 = vpop.f32.mrf.mxu0
        %v1060 = vadd.f32 %v929, %v1059
        %v1061 = vpop.f32.mrf.mxu0
        %v1062 = vadd.f32 %v933, %v1061
        %1063 = vmatprep.mubr.bf16.mxu0 0
        %1064 = vmatmul.mubr.bf16.gmra.mxu0 %v973
        %v1065 = vpop.f32.mrf.mxu0
        %v1066 = vadd.f32 %v929, %v1065
        %v1067 = vpop.f32.mrf.mxu0
        %v1068 = vadd.f32 %v933, %v1067
        %v1069 = vpop.f32.mrf.mxu0
        %v1070 = vadd.f32 %v929, %v1069
        %v1071 = vpop.f32.mrf.mxu0
        %v1072 = vadd.f32 %v933, %v1071
        %1073 = vmatprep.mubr.bf16.mxu0 0
        %1074 = vmatmul.mubr.bf16.gmra.mxu0 %v976
        %v1075 = vpop.f32.mrf.mxu0
        %v1076 = vadd.f32 %v929, %v1075
        %v1077 = vpop.f32.mrf.mxu0
        %v1078 = vadd.f32 %v933, %v1077
        %v1079 = vpop.f32.mrf.mxu0
        %v1080 = vadd.f32 %v929, %v1079
        %v1081 = vpop.f32.mrf.mxu0
        %v1082 = vadd.f32 %v933, %v1081
        %1083 = vmatprep.mubr.bf16.mxu0 0
        %1084 = vmatmul.mubr.bf16.gmra.mxu0 %v979
        %v1085 = vpop.f32.mrf.mxu0
        %v1086 = vadd.f32 %v929, %v1085
        %v1087 = vpop.f32.mrf.mxu0
        %v1088 = vadd.f32 %v933, %v1087
        %v1089 = vpop.f32.mrf.mxu0
        %v1090 = vadd.f32 %v929, %v1089
        %v1091 = vpop.f32.mrf.mxu0
        %v1092 = vadd.f32 %v933, %v1091
        %1093 = vdwg.mxu0
        %v1094 = vmax.f32 %v1016, 0.0
        %v1095 = vmax.f32 %v1018, 0.0
        %v1096 = vmax.f32 %v1020, 0.0
        %v1097 = vmax.f32 %v1022, 0.0
        %v1098 = vmax.f32 %v1026, 0.0
        %v1099 = vmax.f32 %v1028, 0.0
        %v1100 = vmax.f32 %v1030, 0.0
        %v1101 = vmax.f32 %v1032, 0.0
        %v1102 = vmax.f32 %v1036, 0.0
        %v1103 = vmax.f32 %v1038, 0.0
        %v1104 = vmax.f32 %v1040, 0.0
        %v1105 = vmax.f32 %v1042, 0.0
        %v1106 = vmax.f32 %v1046, 0.0
        %v1107 = vmax.f32 %v1048, 0.0
        %v1108 = vmax.f32 %v1050, 0.0
        %v1109 = vmax.f32 %v1052, 0.0
        %v1110 = vmax.f32 %v1056, 0.0
        %v1111 = vmax.f32 %v1058, 0.0
        %v1112 = vmax.f32 %v1060, 0.0
        %v1113 = vmax.f32 %v1062, 0.0
        %v1114 = vmax.f32 %v1066, 0.0
        %v1115 = vmax.f32 %v1068, 0.0
        %v1116 = vmax.f32 %v1070, 0.0
        %v1117 = vmax.f32 %v1072, 0.0
        %v1118 = vmax.f32 %v1076, 0.0
        %v1119 = vmax.f32 %v1078, 0.0
        %v1120 = vmax.f32 %v1080, 0.0
        %v1121 = vmax.f32 %v1082, 0.0
        %v1122 = vmax.f32 %v1086, 0.0
        %v1123 = vmax.f32 %v1088, 0.0
        %v1124 = vmax.f32 %v1090, 0.0
        %v1125 = vmax.f32 %v1092, 0.0
        %v1126 = vpack.c.bf16 %v1096, %v1094
        %v1127 = vpack.c.bf16 %v1097, %v1095
        %v1128 = vpack.c.bf16 %v1100, %v1098
        %v1129 = vpack.c.bf16 %v1101, %v1099
        %v1130 = vpack.c.bf16 %v1104, %v1102
        %v1131 = vpack.c.bf16 %v1105, %v1103
        %v1132 = vpack.c.bf16 %v1108, %v1106
        %v1133 = vpack.c.bf16 %v1109, %v1107
        %v1134 = vpack.c.bf16 %v1112, %v1110
        %v1135 = vpack.c.bf16 %v1113, %v1111
        %v1136 = vpack.c.bf16 %v1116, %v1114
        %v1137 = vpack.c.bf16 %v1117, %v1115
        %v1138 = vpack.c.bf16 %v1120, %v1118
        %v1139 = vpack.c.bf16 %v1121, %v1119
        %v1140 = vpack.c.bf16 %v1124, %v1122
        %v1141 = vpack.c.bf16 %v1125, %v1123
        %v1142 = vld [vmem:[%s5] sm:$0xf]
        %v1143 = vld [vmem:[%s5 + $0x4] sm:$0xf]
        %v1144 = vld [vmem:[%s5 + $0x8] sm:$0xf]
        %v1145 = vld [vmem:[%s5 + $0xc] sm:$0xf]
        %v1146 = vld [vmem:[%s5 + $0x10] sm:$0xf]
        %v1147 = vld [vmem:[%s5 + $0x14] sm:$0xf]
        %v1148 = vld [vmem:[%s5 + $0x18] sm:$0xf]
        %v1149 = vld [vmem:[%s5 + $0x1c] sm:$0xf]
        %v1150 = vld [vmem:[%s5 + $0x20] sm:$0xf]
        %v1151 = vld [vmem:[%s5 + $0x24] sm:$0xf]
        %v1152 = vld [vmem:[%s5 + $0x28] sm:$0xf]
        %v1153 = vld [vmem:[%s5 + $0x2c] sm:$0xf]
        %v1154 = vld [vmem:[%s5 + $0x30] sm:$0xf]
        %v1155 = vld [vmem:[%s5 + $0x34] sm:$0xf]
        %v1156 = vld [vmem:[%s5 + $0x38] sm:$0xf]
        %v1157 = vld [vmem:[%s5 + $0x3c] sm:$0xf]
        %v1158 = vld [vmem:[%s5 + $0x40] sm:$0xf]
        %v1159 = vld [vmem:[%s5 + $0x44] sm:$0xf]
        %v1160 = vld [vmem:[%s5 + $0x48] sm:$0xf]
        %v1161 = vld [vmem:[%s5 + $0x4c] sm:$0xf]
        %v1162 = vld [vmem:[%s5 + $0x50] sm:$0xf]
        %v1163 = vld [vmem:[%s5 + $0x54] sm:$0xf]
        %v1164 = vld [vmem:[%s5 + $0x58] sm:$0xf]
        %v1165 = vld [vmem:[%s5 + $0x5c] sm:$0xf]
        %v1166 = vld [vmem:[%s5 + $0x60] sm:$0xf]
        %v1167 = vld [vmem:[%s5 + $0x64] sm:$0xf]
        %v1168 = vld [vmem:[%s5 + $0x68] sm:$0xf]
        %v1169 = vld [vmem:[%s5 + $0x6c] sm:$0xf]
        %v1170 = vld [vmem:[%s5 + $0x70] sm:$0xf]
        %v1171 = vld [vmem:[%s5 + $0x74] sm:$0xf]
        %v1172 = vld [vmem:[%s5 + $0x78] sm:$0xf]
        %v1173 = vld [vmem:[%s5 + $0x7c] sm:$0xf]
        %v1174 = vld [vmem:[%s6] sm:$0x1]
        %v1176 = vlaneseq
        %v1177 = vshrl.u32 %v1176, 7
        %v1178 = vsub.s32 0, %v1177
        %v1179 = vrot.slane %v1174, %v1178
        %v1213 = vunpack.c.l.b16 %v1142
        %v1214 = vunpack.c.l.b16 %v1143
        %v1215 = vunpack.c.l.b16 %v1144
        %v1216 = vunpack.c.l.b16 %v1145
        %v1217 = vunpack.c.l.b16 %v1146
        %v1218 = vunpack.c.l.b16 %v1147
        %v1219 = vunpack.c.l.b16 %v1148
        %v1220 = vunpack.c.l.b16 %v1149
        %v1221 = vunpack.c.l.b16 %v1150
        %v1222 = vunpack.c.l.b16 %v1151
        %v1223 = vunpack.c.l.b16 %v1152
        %v1224 = vunpack.c.l.b16 %v1153
        %v1225 = vunpack.c.l.b16 %v1154
        %v1226 = vunpack.c.l.b16 %v1155
        %v1227 = vunpack.c.l.b16 %v1156
        %v1228 = vunpack.c.l.b16 %v1157
        %v1229 = vunpack.c.l.b16 %v1158
        %v1230 = vunpack.c.l.b16 %v1159
        %v1231 = vunpack.c.l.b16 %v1160
        %v1232 = vunpack.c.l.b16 %v1161
        %v1233 = vunpack.c.l.b16 %v1162
        %v1234 = vunpack.c.l.b16 %v1163
        %v1235 = vunpack.c.l.b16 %v1164
        %v1236 = vunpack.c.l.b16 %v1165
        %v1237 = vunpack.c.l.b16 %v1166
        %v1238 = vunpack.c.l.b16 %v1167
        %v1239 = vunpack.c.l.b16 %v1168
        %v1240 = vunpack.c.l.b16 %v1169
        %v1241 = vunpack.c.l.b16 %v1170
        %v1242 = vunpack.c.l.b16 %v1171
        %v1243 = vunpack.c.l.b16 %v1172
        %v1244 = vunpack.c.l.b16 %v1173
        %v1245 = vpack.c.b16 %v1214, %v1213
        %v1246 = vpack.c.b16 %v1216, %v1215
        %v1247 = vpack.c.b16 %v1218, %v1217
        %v1248 = vpack.c.b16 %v1220, %v1219
        %v1249 = vpack.c.b16 %v1222, %v1221
        %v1250 = vpack.c.b16 %v1224, %v1223
        %v1251 = vpack.c.b16 %v1226, %v1225
        %v1252 = vpack.c.b16 %v1228, %v1227
        %v1253 = vpack.c.b16 %v1230, %v1229
        %v1254 = vpack.c.b16 %v1232, %v1231
        %v1255 = vpack.c.b16 %v1234, %v1233
        %v1256 = vpack.c.b16 %v1236, %v1235
        %v1257 = vpack.c.b16 %v1238, %v1237
        %v1258 = vpack.c.b16 %v1240, %v1239
        %v1259 = vpack.c.b16 %v1242, %v1241
        %v1260 = vpack.c.b16 %v1244, %v1243
        %1277 = vmatprep.subr.bf16.mxu0 0
        %1278 = vmatpush1.bf16.msra.mxu0 %v1252
        %1279 = vmatprep.subr.bf16.mxu0 0
        %1280 = vmatpush1.bf16.msra.mxu0 %v1251
        %1281 = vmatprep.subr.bf16.mxu0 0
        %1282 = vmatpush1.bf16.msra.mxu0 %v1250
        %1283 = vmatprep.subr.bf16.mxu0 0
        %1284 = vmatpush1.bf16.msra.mxu0 %v1249
        %1285 = vmatprep.subr.bf16.mxu0 0
        %1286 = vmatpush1.bf16.msra.mxu0 %v1248
        %1287 = vmatprep.subr.bf16.mxu0 0
        %1288 = vmatpush1.bf16.msra.mxu0 %v1247
        %1289 = vmatprep.subr.bf16.mxu0 0
        %1290 = vmatpush1.bf16.msra.mxu0 %v1246
        %1291 = vmatprep.subr.bf16.mxu0 0
        %1292 = vmatpush1.bf16.msra.mxu0 %v1245
        %1293 = vmatprep.subr.bf16.mxu0 0
        %1294 = vmatpush2.bf16.msra.mxu0 %v1260
        %1295 = vmatprep.subr.bf16.mxu0 0
        %1296 = vmatpush2.bf16.msra.mxu0 %v1259
        %1297 = vmatprep.subr.bf16.mxu0 0
        %1298 = vmatpush2.bf16.msra.mxu0 %v1258
        %1299 = vmatprep.subr.bf16.mxu0 0
        %1300 = vmatpush2.bf16.msra.mxu0 %v1257
        %1301 = vmatprep.subr.bf16.mxu0 0
        %1302 = vmatpush2.bf16.msra.mxu0 %v1256
        %1303 = vmatprep.subr.bf16.mxu0 0
        %1304 = vmatpush2.bf16.msra.mxu0 %v1255
        %1305 = vmatprep.subr.bf16.mxu0 0
        %1306 = vmatpush2.bf16.msra.mxu0 %v1254
        %1307 = vmatprep.subr.bf16.mxu0 0
        %1308 = vmatpush2.bf16.msra.mxu0 %v1253
        %1309 = vmatprep.mubr.bf16.mxu0 %v1127
        %1310 = vmatmul.mubr.bf16.gmra.mxu0 %v1126
        %v1311 = vpop.f32.mrf.mxu0
        %v1312 = vadd.f32 %v1179, %v1311
        %v1313 = vpop.f32.mrf.mxu0
        %v1314 = vpop.f32.mrf.mxu0
        %v1315 = vadd.f32 %v1179, %v1314
        %v1316 = vpop.f32.mrf.mxu0
        %1317 = vmatprep.mubr.bf16.mxu0 %v1129
        %1318 = vmatmul.mubr.bf16.gmra.mxu0 %v1128
        %v1319 = vpop.f32.mrf.mxu0
        %v1320 = vadd.f32 %v1179, %v1319
        %v1321 = vpop.f32.mrf.mxu0
        %v1322 = vpop.f32.mrf.mxu0
        %v1323 = vadd.f32 %v1179, %v1322
        %v1324 = vpop.f32.mrf.mxu0
        %1325 = vmatprep.mubr.bf16.mxu0 %v1131
        %1326 = vmatmul.mubr.bf16.gmra.mxu0 %v1130
        %v1327 = vpop.f32.mrf.mxu0
        %v1328 = vadd.f32 %v1179, %v1327
        %v1329 = vpop.f32.mrf.mxu0
        %v1330 = vpop.f32.mrf.mxu0
        %v1331 = vadd.f32 %v1179, %v1330
        %v1332 = vpop.f32.mrf.mxu0
        %1333 = vmatprep.mubr.bf16.mxu0 %v1133
        %1334 = vmatmul.mubr.bf16.gmra.mxu0 %v1132
        %v1335 = vpop.f32.mrf.mxu0
        %v1336 = vadd.f32 %v1179, %v1335
        %v1337 = vpop.f32.mrf.mxu0
        %v1338 = vpop.f32.mrf.mxu0
        %v1339 = vadd.f32 %v1179, %v1338
        %v1340 = vpop.f32.mrf.mxu0
        %1341 = vmatprep.mubr.bf16.mxu0 %v1135
        %1342 = vmatmul.mubr.bf16.gmra.mxu0 %v1134
        %v1343 = vpop.f32.mrf.mxu0
        %v1344 = vadd.f32 %v1179, %v1343
        %v1345 = vpop.f32.mrf.mxu0
        %v1346 = vpop.f32.mrf.mxu0
        %v1347 = vadd.f32 %v1179, %v1346
        %v1348 = vpop.f32.mrf.mxu0
        %1349 = vmatprep.mubr.bf16.mxu0 %v1137
        %1350 = vmatmul.mubr.bf16.gmra.mxu0 %v1136
        %v1351 = vpop.f32.mrf.mxu0
        %v1352 = vadd.f32 %v1179, %v1351
        %v1353 = vpop.f32.mrf.mxu0
        %v1354 = vpop.f32.mrf.mxu0
        %v1355 = vadd.f32 %v1179, %v1354
        %v1356 = vpop.f32.mrf.mxu0
        %1357 = vmatprep.mubr.bf16.mxu0 %v1139
        %1358 = vmatmul.mubr.bf16.gmra.mxu0 %v1138
        %v1359 = vpop.f32.mrf.mxu0
        %v1360 = vadd.f32 %v1179, %v1359
        %v1361 = vpop.f32.mrf.mxu0
        %v1362 = vpop.f32.mrf.mxu0
        %v1363 = vadd.f32 %v1179, %v1362
        %v1364 = vpop.f32.mrf.mxu0
        %1365 = vmatprep.mubr.bf16.mxu0 %v1141
        %1366 = vmatmul.mubr.bf16.gmra.mxu0 %v1140
        %v1367 = vpop.f32.mrf.mxu0
        %v1368 = vadd.f32 %v1179, %v1367
        %v1369 = vpop.f32.mrf.mxu0
        %v1370 = vpop.f32.mrf.mxu0
        %v1371 = vadd.f32 %v1179, %v1370
        %v1372 = vpop.f32.mrf.mxu0
        %1373 = vdwg.mxu0
        %v1374 = vmul.f32 %v1312, %v648
        %v1375 = vmul.f32 %v1315, %v649
        %v1376 = vmul.f32 %v1320, %v650
        %v1377 = vmul.f32 %v1323, %v651
        %v1378 = vmul.f32 %v1328, %v652
        %v1379 = vmul.f32 %v1331, %v653
        %v1380 = vmul.f32 %v1336, %v654
        %v1381 = vmul.f32 %v1339, %v655
        %v1382 = vmul.f32 %v1344, %v656
        %v1383 = vmul.f32 %v1347, %v657
        %v1384 = vmul.f32 %v1352, %v658
        %v1385 = vmul.f32 %v1355, %v659
        %v1386 = vmul.f32 %v1360, %v660
        %v1387 = vmul.f32 %v1363, %v661
        %v1388 = vmul.f32 %v1368, %v662
        %v1389 = vmul.f32 %v1371, %v663
        %v1390 = vld [vmem:[%s7] sm:$0xff]
        %v1391 = vld [vmem:[%s7 + $0x8] sm:$0xff]
        %v1392 = vld [vmem:[%s7 + $0x10] sm:$0xff]
        %v1393 = vld [vmem:[%s7 + $0x18] sm:$0xff]
        %v1394 = vld [vmem:[%s7 + $0x20] sm:$0xff]
        %v1395 = vld [vmem:[%s7 + $0x28] sm:$0xff]
        %v1396 = vld [vmem:[%s7 + $0x30] sm:$0xff]
        %v1397 = vld [vmem:[%s7 + $0x38] sm:$0xff]
        %vm1398 = vcmask 523264
        %v1400 = vsel %vm1398, %v1374, 0
        %v1403 = vsel %vm1398, %v1375, 0
        %v1406 = vsel %vm1398, %v1376, 0
        %v1409 = vsel %vm1398, %v1377, 0
        %v1412 = vsel %vm1398, %v1378, 0
        %v1415 = vsel %vm1398, %v1379, 0
        %v1418 = vsel %vm1398, %v1380, 0
        %v1421 = vsel %vm1398, %v1381, 0
        %v1424 = vsel %vm1398, %v1382, 0
        %v1427 = vsel %vm1398, %v1383, 0
        %v1430 = vsel %vm1398, %v1384, 0
        %v1433 = vsel %vm1398, %v1385, 0
        %v1436 = vsel %vm1398, %v1386, 0
        %v1439 = vsel %vm1398, %v1387, 0
        %v1442 = vsel %vm1398, %v1388, 0
        %v1445 = vsel %vm1398, %v1389, 0
        %1447 = vmatprep.subr.mxu0 0.0
        %1448 = vmatpush1.msra.mxu0 0.0
        %1449 = vmatprep.subr.mxu0 0.0
        %1450 = vmatpush1.msra.mxu0 0.0
        %1451 = vmatprep.subr.mxu0 0.0
        %1452 = vmatpush1.msra.mxu0 0.0
        %1453 = vmatprep.subr.mxu0 0.0
        %1454 = vmatpush1.msra.mxu0 0.0
        %1455 = vmatprep.subr.mxu0 0.0
        %1456 = vmatpush1.msra.mxu0 0.0
        %1457 = vmatprep.subr.mxu0 0.0
        %1458 = vmatpush1.msra.mxu0 0.0
        %1459 = vmatprep.subr.mxu0 0.0
        %1460 = vmatpush1.msra.mxu0 0.0
        %1461 = vmatprep.subr.mxu0 0.0
        %1462 = vmatpush1.msra.mxu0 0.0
        %1463 = vmatprep.subr.mxu0 0.0
        %1464 = vmatpush1.msra.mxu0 %v1397
        %1465 = vmatprep.subr.mxu0 0.0
        %1466 = vmatpush1.msra.mxu0 %v1396
        %1467 = vmatprep.subr.mxu0 0.0
        %1468 = vmatpush1.msra.mxu0 %v1395
        %1469 = vmatprep.subr.mxu0 0.0
        %1470 = vmatpush1.msra.mxu0 %v1394
        %1471 = vmatprep.subr.mxu0 0.0
        %1472 = vmatpush1.msra.mxu0 %v1393
        %1473 = vmatprep.subr.mxu0 0.0
        %1474 = vmatpush1.msra.mxu0 %v1392
        %1475 = vmatprep.subr.mxu0 0.0
        %1476 = vmatpush1.msra.mxu0 %v1391
        %1477 = vmatprep.subr.mxu0 0.0
        %1478 = vmatpush1.msra.mxu0 %v1390
        %1479 = vmatprep.subr.mxu0 0.0
        %1480 = vmatpush2.msra.mxu0 0.0
        %1481 = vmatprep.subr.mxu0 0.0
        %1482 = vmatpush2.msra.mxu0 0.0
        %1483 = vmatprep.subr.mxu0 0.0
        %1484 = vmatpush2.msra.mxu0 0.0
        %1485 = vmatprep.subr.mxu0 0.0
        %1486 = vmatpush2.msra.mxu0 0.0
        %1487 = vmatprep.subr.mxu0 0.0
        %1488 = vmatpush2.msra.mxu0 0.0
        %1489 = vmatprep.subr.mxu0 0.0
        %1490 = vmatpush2.msra.mxu0 0.0
        %1491 = vmatprep.subr.mxu0 0.0
        %1492 = vmatpush2.msra.mxu0 0.0
        %1493 = vmatprep.subr.mxu0 0.0
        %1494 = vmatpush2.msra.mxu0 0.0
        %1495 = vmatprep.subr.mxu0 0.0
        %1496 = vmatpush2.msra.mxu0 0.0
        %1497 = vmatprep.subr.mxu0 0.0
        %1498 = vmatpush2.msra.mxu0 0.0
        %1499 = vmatprep.subr.mxu0 0.0
        %1500 = vmatpush2.msra.mxu0 0.0
        %1501 = vmatprep.subr.mxu0 0.0
        %1502 = vmatpush2.msra.mxu0 0.0
        %1503 = vmatprep.subr.mxu0 0.0
        %1504 = vmatpush2.msra.mxu0 0.0
        %1505 = vmatprep.subr.mxu0 0.0
        %1506 = vmatpush2.msra.mxu0 0.0
        %1507 = vmatprep.subr.mxu0 0.0
        %1508 = vmatpush2.msra.mxu0 0.0
        %1509 = vmatprep.subr.mxu0 0.0
        %1510 = vmatpush2.msra.mxu0 0.0
        %1511 = vmatprep.mubr.f32.mxu0 0.0
        %1512 = vmatmul.mubr.f32.gmra.mxu0 %v1400
        %v1513 = vpop.f32.mrf.mxu0
        %v1514 = vadd.f32 0.0, %v1513
        %v1515 = vpop.f32.mrf.mxu0
        %1516 = vmatprep.mubr.f32.mxu0 0.0
        %1517 = vmatmul.mubr.f32.gmra.mxu0 %v1403
        %v1518 = vpop.f32.mrf.mxu0
        %v1519 = vadd.f32 0.0, %v1518
        %v1520 = vpop.f32.mrf.mxu0
        %1521 = vmatprep.mubr.f32.mxu0 0.0
        %1522 = vmatmul.mubr.f32.gmra.mxu0 %v1406
        %v1523 = vpop.f32.mrf.mxu0
        %v1524 = vadd.f32 0.0, %v1523
        %v1525 = vpop.f32.mrf.mxu0
        %1526 = vmatprep.mubr.f32.mxu0 0.0
        %1527 = vmatmul.mubr.f32.gmra.mxu0 %v1409
        %v1528 = vpop.f32.mrf.mxu0
        %v1529 = vadd.f32 0.0, %v1528
        %v1530 = vpop.f32.mrf.mxu0
        %1531 = vmatprep.mubr.f32.mxu0 0.0
        %1532 = vmatmul.mubr.f32.gmra.mxu0 %v1412
        %v1533 = vpop.f32.mrf.mxu0
        %v1534 = vadd.f32 0.0, %v1533
        %v1535 = vpop.f32.mrf.mxu0
        %1536 = vmatprep.mubr.f32.mxu0 0.0
        %1537 = vmatmul.mubr.f32.gmra.mxu0 %v1415
        %v1538 = vpop.f32.mrf.mxu0
        %v1539 = vadd.f32 0.0, %v1538
        %v1540 = vpop.f32.mrf.mxu0
        %1541 = vmatprep.mubr.f32.mxu0 0.0
        %1542 = vmatmul.mubr.f32.gmra.mxu0 %v1418
        %v1543 = vpop.f32.mrf.mxu0
        %v1544 = vadd.f32 0.0, %v1543
        %v1545 = vpop.f32.mrf.mxu0
        %1546 = vmatprep.mubr.f32.mxu0 0.0
        %1547 = vmatmul.mubr.f32.gmra.mxu0 %v1421
        %v1548 = vpop.f32.mrf.mxu0
        %v1549 = vadd.f32 0.0, %v1548
        %v1550 = vpop.f32.mrf.mxu0
        %1551 = vmatprep.mubr.f32.mxu0 0.0
        %1552 = vmatmul.mubr.f32.gmra.mxu0 %v1424
        %v1553 = vpop.f32.mrf.mxu0
        %v1554 = vadd.f32 0.0, %v1553
        %v1555 = vpop.f32.mrf.mxu0
        %1556 = vmatprep.mubr.f32.mxu0 0.0
        %1557 = vmatmul.mubr.f32.gmra.mxu0 %v1427
        %v1558 = vpop.f32.mrf.mxu0
        %v1559 = vadd.f32 0.0, %v1558
        %v1560 = vpop.f32.mrf.mxu0
        %1561 = vmatprep.mubr.f32.mxu0 0.0
        %1562 = vmatmul.mubr.f32.gmra.mxu0 %v1430
        %v1563 = vpop.f32.mrf.mxu0
        %v1564 = vadd.f32 0.0, %v1563
        %v1565 = vpop.f32.mrf.mxu0
        %1566 = vmatprep.mubr.f32.mxu0 0.0
        %1567 = vmatmul.mubr.f32.gmra.mxu0 %v1433
        %v1568 = vpop.f32.mrf.mxu0
        %v1569 = vadd.f32 0.0, %v1568
        %v1570 = vpop.f32.mrf.mxu0
        %1571 = vmatprep.mubr.f32.mxu0 0.0
        %1572 = vmatmul.mubr.f32.gmra.mxu0 %v1436
        %v1573 = vpop.f32.mrf.mxu0
        %v1574 = vadd.f32 0.0, %v1573
        %v1575 = vpop.f32.mrf.mxu0
        %1576 = vmatprep.mubr.f32.mxu0 0.0
        %1577 = vmatmul.mubr.f32.gmra.mxu0 %v1439
        %v1578 = vpop.f32.mrf.mxu0
        %v1579 = vadd.f32 0.0, %v1578
        %v1580 = vpop.f32.mrf.mxu0
        %1581 = vmatprep.mubr.f32.mxu0 0.0
        %1582 = vmatmul.mubr.f32.gmra.mxu0 %v1442
        %v1583 = vpop.f32.mrf.mxu0
        %v1584 = vadd.f32 0.0, %v1583
        %v1585 = vpop.f32.mrf.mxu0
        %1586 = vmatprep.mubr.f32.mxu0 0.0
        %1587 = vmatmul.mubr.f32.gmra.mxu0 %v1445
        %v1588 = vpop.f32.mrf.mxu0
        %v1589 = vadd.f32 0.0, %v1588
        %v1590 = vpop.f32.mrf.mxu0
        %1591 = vdwg.mxu0
        %vm1608 = vcmask 1040384
        %v1609 = vrot.slane %v1514, 7
        %v1610 = vrot.slane %v1519, 7
        %v1611 = vsel %vm1608, %v1609, %v1610
        %v1612 = vrot.slane %v1524, 7
        %v1613 = vsel %vm1608, %v1610, %v1612
        %v1614 = vrot.slane %v1529, 7
        %v1615 = vsel %vm1608, %v1612, %v1614
        %v1616 = vrot.slane %v1534, 7
        %v1617 = vsel %vm1608, %v1614, %v1616
        %v1618 = vrot.slane %v1539, 7
        %v1619 = vsel %vm1608, %v1616, %v1618
        %v1620 = vrot.slane %v1544, 7
        %v1621 = vsel %vm1608, %v1618, %v1620
        %v1622 = vrot.slane %v1549, 7
        %v1623 = vsel %vm1608, %v1620, %v1622
        %v1624 = vrot.slane %v1554, 7
        %v1625 = vsel %vm1608, %v1622, %v1624
        %v1626 = vrot.slane %v1559, 7
        %v1627 = vsel %vm1608, %v1624, %v1626
        %v1628 = vrot.slane %v1564, 7
        %v1629 = vsel %vm1608, %v1626, %v1628
        %v1630 = vrot.slane %v1569, 7
        %v1631 = vsel %vm1608, %v1628, %v1630
        %v1632 = vrot.slane %v1574, 7
        %v1633 = vsel %vm1608, %v1630, %v1632
        %v1634 = vrot.slane %v1579, 7
        %v1635 = vsel %vm1608, %v1632, %v1634
        %v1636 = vrot.slane %v1584, 7
        %v1637 = vsel %vm1608, %v1634, %v1636
        %v1638 = vrot.slane %v1589, 7
        %v1639 = vsel %vm1608, %v1636, %v1638
        %v1656 = vsel %vm1608, 0.0, %v1609
        %1657 = vrot.lane.b32.xlu0 %v1514, 124
        %v1658 = vpop.permute.xlu0 %1657
        %1659 = vrot.lane.b32.xlu0 %v1519, 124
        %v1660 = vpop.permute.xlu0 %1659
        %1661 = vrot.lane.b32.xlu0 %v1524, 124
        %v1662 = vpop.permute.xlu0 %1661
        %1663 = vrot.lane.b32.xlu0 %v1529, 124
        %v1664 = vpop.permute.xlu0 %1663
        %1665 = vrot.lane.b32.xlu0 %v1534, 124
        %v1666 = vpop.permute.xlu0 %1665
        %1667 = vrot.lane.b32.xlu0 %v1539, 124
        %v1668 = vpop.permute.xlu0 %1667
        %1669 = vrot.lane.b32.xlu0 %v1544, 124
        %v1670 = vpop.permute.xlu0 %1669
        %1671 = vrot.lane.b32.xlu0 %v1549, 124
        %v1672 = vpop.permute.xlu0 %1671
        %1673 = vrot.lane.b32.xlu0 %v1554, 124
        %v1674 = vpop.permute.xlu0 %1673
        %1675 = vrot.lane.b32.xlu0 %v1559, 124
        %v1676 = vpop.permute.xlu0 %1675
        %1677 = vrot.lane.b32.xlu0 %v1564, 124
        %v1678 = vpop.permute.xlu0 %1677
        %1679 = vrot.lane.b32.xlu0 %v1569, 124
        %v1680 = vpop.permute.xlu0 %1679
        %1681 = vrot.lane.b32.xlu0 %v1574, 124
        %v1682 = vpop.permute.xlu0 %1681
        %1683 = vrot.lane.b32.xlu0 %v1579, 124
        %v1684 = vpop.permute.xlu0 %1683
        %1685 = vrot.lane.b32.xlu0 %v1584, 124
        %v1686 = vpop.permute.xlu0 %1685
        %1687 = vrot.lane.b32.xlu0 %v1589, 124
        %v1688 = vpop.permute.xlu0 %1687
        %v1705 = vadd.f32 %v1656, %v1658
        %v1706 = vadd.f32 %v1611, %v1660
        %v1707 = vadd.f32 %v1613, %v1662
        %v1708 = vadd.f32 %v1615, %v1664
        %v1709 = vadd.f32 %v1617, %v1666
        %v1710 = vadd.f32 %v1619, %v1668
        %v1711 = vadd.f32 %v1621, %v1670
        %v1712 = vadd.f32 %v1623, %v1672
        %v1713 = vadd.f32 %v1625, %v1674
        %v1714 = vadd.f32 %v1627, %v1676
        %v1715 = vadd.f32 %v1629, %v1678
        %v1716 = vadd.f32 %v1631, %v1680
        %v1717 = vadd.f32 %v1633, %v1682
        %v1718 = vadd.f32 %v1635, %v1684
        %v1719 = vadd.f32 %v1637, %v1686
        %v1720 = vadd.f32 %v1639, %v1688
        %vm1721 = vcmask 1046528
        %v1722 = vrot.slane %v1514, 1
        %v1723 = vrot.slane %v1519, 1
        %v1724 = vsel %vm1721, %v1722, %v1723
        %v1725 = vrot.slane %v1524, 1
        %v1726 = vsel %vm1721, %v1723, %v1725
        %v1727 = vrot.slane %v1529, 1
        %v1728 = vsel %vm1721, %v1725, %v1727
        %v1729 = vrot.slane %v1534, 1
        %v1730 = vsel %vm1721, %v1727, %v1729
        %v1731 = vrot.slane %v1539, 1
        %v1732 = vsel %vm1721, %v1729, %v1731
        %v1733 = vrot.slane %v1544, 1
        %v1734 = vsel %vm1721, %v1731, %v1733
        %v1735 = vrot.slane %v1549, 1
        %v1736 = vsel %vm1721, %v1733, %v1735
        %v1737 = vrot.slane %v1554, 1
        %v1738 = vsel %vm1721, %v1735, %v1737
        %v1739 = vrot.slane %v1559, 1
        %v1740 = vsel %vm1721, %v1737, %v1739
        %v1741 = vrot.slane %v1564, 1
        %v1742 = vsel %vm1721, %v1739, %v1741
        %v1743 = vrot.slane %v1569, 1
        %v1744 = vsel %vm1721, %v1741, %v1743
        %v1745 = vrot.slane %v1574, 1
        %v1746 = vsel %vm1721, %v1743, %v1745
        %v1747 = vrot.slane %v1579, 1
        %v1748 = vsel %vm1721, %v1745, %v1747
        %v1749 = vrot.slane %v1584, 1
        %v1750 = vsel %vm1721, %v1747, %v1749
        %v1751 = vrot.slane %v1589, 1
        %v1752 = vsel %vm1721, %v1749, %v1751
        %v1754 = vsel %vm1721, %v1751, 0.0
        %1756 = vrot.lane.b32.xlu0 %v1724, 120
        %v1757 = vpop.permute.xlu0 %1756
        %1758 = vrot.lane.b32.xlu0 %v1726, 120
        %v1759 = vpop.permute.xlu0 %1758
        %1760 = vrot.lane.b32.xlu0 %v1728, 120
        %v1761 = vpop.permute.xlu0 %1760
        %1762 = vrot.lane.b32.xlu0 %v1730, 120
        %v1763 = vpop.permute.xlu0 %1762
        %1764 = vrot.lane.b32.xlu0 %v1732, 120
        %v1765 = vpop.permute.xlu0 %1764
        %1766 = vrot.lane.b32.xlu0 %v1734, 120
        %v1767 = vpop.permute.xlu0 %1766
        %1768 = vrot.lane.b32.xlu0 %v1736, 120
        %v1769 = vpop.permute.xlu0 %1768
        %1770 = vrot.lane.b32.xlu0 %v1738, 120
        %v1771 = vpop.permute.xlu0 %1770
        %1772 = vrot.lane.b32.xlu0 %v1740, 120
        %v1773 = vpop.permute.xlu0 %1772
        %1774 = vrot.lane.b32.xlu0 %v1742, 120
        %v1775 = vpop.permute.xlu0 %1774
        %1776 = vrot.lane.b32.xlu0 %v1744, 120
        %v1777 = vpop.permute.xlu0 %1776
        %1778 = vrot.lane.b32.xlu0 %v1746, 120
        %v1779 = vpop.permute.xlu0 %1778
        %1780 = vrot.lane.b32.xlu0 %v1748, 120
        %v1781 = vpop.permute.xlu0 %1780
        %1782 = vrot.lane.b32.xlu0 %v1750, 120
        %v1783 = vpop.permute.xlu0 %1782
        %1784 = vrot.lane.b32.xlu0 %v1752, 120
        %v1785 = vpop.permute.xlu0 %1784
        %1786 = vrot.lane.b32.xlu0 %v1754, 120
        %v1787 = vpop.permute.xlu0 %1786
        %v1804 = vadd.f32 %v1705, %v1757
        %v1805 = vadd.f32 %v1706, %v1759
        %v1806 = vadd.f32 %v1707, %v1761
        %v1807 = vadd.f32 %v1708, %v1763
        %v1808 = vadd.f32 %v1709, %v1765
        %v1809 = vadd.f32 %v1710, %v1767
        %v1810 = vadd.f32 %v1711, %v1769
        %v1811 = vadd.f32 %v1712, %v1771
        %v1812 = vadd.f32 %v1713, %v1773
        %v1813 = vadd.f32 %v1714, %v1775
        %v1814 = vadd.f32 %v1715, %v1777
        %v1815 = vadd.f32 %v1716, %v1779
        %v1816 = vadd.f32 %v1717, %v1781
        %v1817 = vadd.f32 %v1718, %v1783
        %v1818 = vadd.f32 %v1719, %v1785
        %v1819 = vadd.f32 %v1720, %v1787
        %v1820 = vld [vmem:[%s8] sm:$0x1]
        %v1822 = vlaneseq
        %v1823 = vshrl.u32 %v1822, 7
        %v1824 = vsub.s32 0, %v1823
        %v1825 = vrot.slane %v1820, %v1824
        %v1827 = vadd.f32 %v1804, %v1825
        %v1828 = vadd.f32 %v1805, %v1825
        %v1829 = vadd.f32 %v1806, %v1825
        %v1830 = vadd.f32 %v1807, %v1825
        %v1831 = vadd.f32 %v1808, %v1825
        %v1832 = vadd.f32 %v1809, %v1825
        %v1833 = vadd.f32 %v1810, %v1825
        %v1834 = vadd.f32 %v1811, %v1825
        %v1835 = vadd.f32 %v1812, %v1825
        %v1836 = vadd.f32 %v1813, %v1825
        %v1837 = vadd.f32 %v1814, %v1825
        %v1838 = vadd.f32 %v1815, %v1825
        %v1839 = vadd.f32 %v1816, %v1825
        %v1840 = vadd.f32 %v1817, %v1825
        %v1841 = vadd.f32 %v1818, %v1825
        %v1842 = vadd.f32 %v1819, %v1825
        %v1843 = vmul.f32 %v1827, %v648
        %v1844 = vmul.f32 %v1828, %v649
        %v1845 = vmul.f32 %v1829, %v650
        %v1846 = vmul.f32 %v1830, %v651
        %v1847 = vmul.f32 %v1831, %v652
        %v1848 = vmul.f32 %v1832, %v653
        %v1849 = vmul.f32 %v1833, %v654
        %v1850 = vmul.f32 %v1834, %v655
        %v1851 = vmul.f32 %v1835, %v656
        %v1852 = vmul.f32 %v1836, %v657
        %v1853 = vmul.f32 %v1837, %v658
        %v1854 = vmul.f32 %v1838, %v659
        %v1855 = vmul.f32 %v1839, %v660
        %v1856 = vmul.f32 %v1840, %v661
        %v1857 = vmul.f32 %v1841, %v662
        %v1858 = vmul.f32 %v1842, %v663
        %v1875 = vrot.slane %v1843, 7
        %v1876 = vrot.slane %v1844, 7
        %v1877 = vsel %vm1608, %v1875, %v1876
        %v1878 = vrot.slane %v1845, 7
        %v1879 = vsel %vm1608, %v1876, %v1878
        %v1880 = vrot.slane %v1846, 7
        %v1881 = vsel %vm1608, %v1878, %v1880
        %v1882 = vrot.slane %v1847, 7
        %v1883 = vsel %vm1608, %v1880, %v1882
        %v1884 = vrot.slane %v1848, 7
        %v1885 = vsel %vm1608, %v1882, %v1884
        %v1886 = vrot.slane %v1849, 7
        %v1887 = vsel %vm1608, %v1884, %v1886
        %v1888 = vrot.slane %v1850, 7
        %v1889 = vsel %vm1608, %v1886, %v1888
        %v1890 = vrot.slane %v1851, 7
        %v1891 = vsel %vm1608, %v1888, %v1890
        %v1892 = vrot.slane %v1852, 7
        %v1893 = vsel %vm1608, %v1890, %v1892
        %v1894 = vrot.slane %v1853, 7
        %v1895 = vsel %vm1608, %v1892, %v1894
        %v1896 = vrot.slane %v1854, 7
        %v1897 = vsel %vm1608, %v1894, %v1896
        %v1898 = vrot.slane %v1855, 7
        %v1899 = vsel %vm1608, %v1896, %v1898
        %v1900 = vrot.slane %v1856, 7
        %v1901 = vsel %vm1608, %v1898, %v1900
        %v1902 = vrot.slane %v1857, 7
        %v1903 = vsel %vm1608, %v1900, %v1902
        %v1904 = vrot.slane %v1858, 7
        %v1905 = vsel %vm1608, %v1902, %v1904
        %v1922 = vsel %vm1608, 0.0, %v1875
        %v1923 = vrot.slane %v1843, 1
        %v1924 = vrot.slane %v1844, 1
        %v1925 = vsel %vm1721, %v1923, %v1924
        %v1926 = vrot.slane %v1845, 1
        %v1927 = vsel %vm1721, %v1924, %v1926
        %v1928 = vrot.slane %v1846, 1
        %v1929 = vsel %vm1721, %v1926, %v1928
        %v1930 = vrot.slane %v1847, 1
        %v1931 = vsel %vm1721, %v1928, %v1930
        %v1932 = vrot.slane %v1848, 1
        %v1933 = vsel %vm1721, %v1930, %v1932
        %v1934 = vrot.slane %v1849, 1
        %v1935 = vsel %vm1721, %v1932, %v1934
        %v1936 = vrot.slane %v1850, 1
        %v1937 = vsel %vm1721, %v1934, %v1936
        %v1938 = vrot.slane %v1851, 1
        %v1939 = vsel %vm1721, %v1936, %v1938
        %v1940 = vrot.slane %v1852, 1
        %v1941 = vsel %vm1721, %v1938, %v1940
        %v1942 = vrot.slane %v1853, 1
        %v1943 = vsel %vm1721, %v1940, %v1942
        %v1944 = vrot.slane %v1854, 1
        %v1945 = vsel %vm1721, %v1942, %v1944
        %v1946 = vrot.slane %v1855, 1
        %v1947 = vsel %vm1721, %v1944, %v1946
        %v1948 = vrot.slane %v1856, 1
        %v1949 = vsel %vm1721, %v1946, %v1948
        %v1950 = vrot.slane %v1857, 1
        %v1951 = vsel %vm1721, %v1948, %v1950
        %v1952 = vrot.slane %v1858, 1
        %v1953 = vsel %vm1721, %v1950, %v1952
        %v1955 = vsel %vm1721, %v1952, 0.0
        %1956 = vrot.lane.b32.xlu0 %v1843, 4
        %v1957 = vpop.permute.xlu0 %1956
        %1958 = vrot.lane.b32.xlu0 %v1844, 4
        %v1959 = vpop.permute.xlu0 %1958
        %1960 = vrot.lane.b32.xlu0 %v1845, 4
        %v1961 = vpop.permute.xlu0 %1960
        %1962 = vrot.lane.b32.xlu0 %v1846, 4
        %v1963 = vpop.permute.xlu0 %1962
        %1964 = vrot.lane.b32.xlu0 %v1847, 4
        %v1965 = vpop.permute.xlu0 %1964
        %1966 = vrot.lane.b32.xlu0 %v1848, 4
        %v1967 = vpop.permute.xlu0 %1966
        %1968 = vrot.lane.b32.xlu0 %v1849, 4
        %v1969 = vpop.permute.xlu0 %1968
        %1970 = vrot.lane.b32.xlu0 %v1850, 4
        %v1971 = vpop.permute.xlu0 %1970
        %1972 = vrot.lane.b32.xlu0 %v1851, 4
        %v1973 = vpop.permute.xlu0 %1972
        %1974 = vrot.lane.b32.xlu0 %v1852, 4
        %v1975 = vpop.permute.xlu0 %1974
        %1976 = vrot.lane.b32.xlu0 %v1853, 4
        %v1977 = vpop.permute.xlu0 %1976
        %1978 = vrot.lane.b32.xlu0 %v1854, 4
        %v1979 = vpop.permute.xlu0 %1978
        %1980 = vrot.lane.b32.xlu0 %v1855, 4
        %v1981 = vpop.permute.xlu0 %1980
        %1982 = vrot.lane.b32.xlu0 %v1856, 4
        %v1983 = vpop.permute.xlu0 %1982
        %1984 = vrot.lane.b32.xlu0 %v1857, 4
        %v1985 = vpop.permute.xlu0 %1984
        %1986 = vrot.lane.b32.xlu0 %v1858, 4
        %v1987 = vpop.permute.xlu0 %1986
        %2005 = vrot.lane.b32.xlu0 %v1925, 8
        %v2006 = vpop.permute.xlu0 %2005
        %2007 = vrot.lane.b32.xlu0 %v1927, 8
        %v2008 = vpop.permute.xlu0 %2007
        %2009 = vrot.lane.b32.xlu0 %v1929, 8
        %v2010 = vpop.permute.xlu0 %2009
        %2011 = vrot.lane.b32.xlu0 %v1931, 8
        %v2012 = vpop.permute.xlu0 %2011
        %2013 = vrot.lane.b32.xlu0 %v1933, 8
        %v2014 = vpop.permute.xlu0 %2013
        %2015 = vrot.lane.b32.xlu0 %v1935, 8
        %v2016 = vpop.permute.xlu0 %2015
        %2017 = vrot.lane.b32.xlu0 %v1937, 8
        %v2018 = vpop.permute.xlu0 %2017
        %2019 = vrot.lane.b32.xlu0 %v1939, 8
        %v2020 = vpop.permute.xlu0 %2019
        %2021 = vrot.lane.b32.xlu0 %v1941, 8
        %v2022 = vpop.permute.xlu0 %2021
        %2023 = vrot.lane.b32.xlu0 %v1943, 8
        %v2024 = vpop.permute.xlu0 %2023
        %2025 = vrot.lane.b32.xlu0 %v1945, 8
        %v2026 = vpop.permute.xlu0 %2025
        %2027 = vrot.lane.b32.xlu0 %v1947, 8
        %v2028 = vpop.permute.xlu0 %2027
        %2029 = vrot.lane.b32.xlu0 %v1949, 8
        %v2030 = vpop.permute.xlu0 %2029
        %2031 = vrot.lane.b32.xlu0 %v1951, 8
        %v2032 = vpop.permute.xlu0 %2031
        %2033 = vrot.lane.b32.xlu0 %v1953, 8
        %v2034 = vpop.permute.xlu0 %2033
        %2035 = vrot.lane.b32.xlu0 %v1955, 8
        %v2036 = vpop.permute.xlu0 %2035
        %vm2053 = vcmask 31744
        %v2054 = vsel %vm2053, %v1922, %v1957
        %v2055 = vsel %vm2053, %v1877, %v1959
        %v2056 = vsel %vm2053, %v1879, %v1961
        %v2057 = vsel %vm2053, %v1881, %v1963
        %v2058 = vsel %vm2053, %v1883, %v1965
        %v2059 = vsel %vm2053, %v1885, %v1967
        %v2060 = vsel %vm2053, %v1887, %v1969
        %v2061 = vsel %vm2053, %v1889, %v1971
        %v2062 = vsel %vm2053, %v1891, %v1973
        %v2063 = vsel %vm2053, %v1893, %v1975
        %v2064 = vsel %vm2053, %v1895, %v1977
        %v2065 = vsel %vm2053, %v1897, %v1979
        %v2066 = vsel %vm2053, %v1899, %v1981
        %v2067 = vsel %vm2053, %v1901, %v1983
        %v2068 = vsel %vm2053, %v1903, %v1985
        %v2069 = vsel %vm2053, %v1905, %v1987
        %vm2070 = vcmask 64512
        %v2071 = vsel %vm2070, %v2054, %v2006
        %v2072 = vsel %vm2070, %v2055, %v2008
        %v2073 = vsel %vm2070, %v2056, %v2010
        %v2074 = vsel %vm2070, %v2057, %v2012
        %v2075 = vsel %vm2070, %v2058, %v2014
        %v2076 = vsel %vm2070, %v2059, %v2016
        %v2077 = vsel %vm2070, %v2060, %v2018
        %v2078 = vsel %vm2070, %v2061, %v2020
        %v2079 = vsel %vm2070, %v2062, %v2022
        %v2080 = vsel %vm2070, %v2063, %v2024
        %v2081 = vsel %vm2070, %v2064, %v2026
        %v2082 = vsel %vm2070, %v2065, %v2028
        %v2083 = vsel %vm2070, %v2066, %v2030
        %v2084 = vsel %vm2070, %v2067, %v2032
        %v2085 = vsel %vm2070, %v2068, %v2034
        %v2086 = vsel %vm2070, %v2069, %v2036
        %v2087 = vld [vmem:[%s9] sm:$0x3]
        %v2088 = vld [vmem:[%s10] sm:$0x3]
        %2090 = vset.pattern.permute.xlu0 0
        %2091 = vperm.xlu0 %2090, %v2088
        %v2092 = vpop.permute.xlu0 %2091
        %vm2094 = vcmask 97280
        %v2096 = vsel %vm2094, %v2087, 0
        %v2099 = vsel %vm2094, %v2071, 0
        %v2102 = vsel %vm2094, %v2072, 0
        %v2105 = vsel %vm2094, %v2073, 0
        %v2108 = vsel %vm2094, %v2074, 0
        %v2111 = vsel %vm2094, %v2075, 0
        %v2114 = vsel %vm2094, %v2076, 0
        %v2117 = vsel %vm2094, %v2077, 0
        %v2120 = vsel %vm2094, %v2078, 0
        %v2123 = vsel %vm2094, %v2079, 0
        %v2126 = vsel %vm2094, %v2080, 0
        %v2129 = vsel %vm2094, %v2081, 0
        %v2132 = vsel %vm2094, %v2082, 0
        %v2135 = vsel %vm2094, %v2083, 0
        %v2138 = vsel %vm2094, %v2084, 0
        %v2141 = vsel %vm2094, %v2085, 0
        %v2144 = vsel %vm2094, %v2086, 0
        %2146 = vmatprep.subr.mxu0 0.0
        %2147 = vmatpush1.xpose.msra.mxu0 %v2144
        %2148 = vmatprep.subr.mxu0 0.0
        %2149 = vmatpush1.xpose.msra.mxu0 %v2141
        %2150 = vmatprep.subr.mxu0 0.0
        %2151 = vmatpush1.xpose.msra.mxu0 %v2138
        %2152 = vmatprep.subr.mxu0 0.0
        %2153 = vmatpush1.xpose.msra.mxu0 %v2135
        %2154 = vmatprep.subr.mxu0 0.0
        %2155 = vmatpush1.xpose.msra.mxu0 %v2132
        %2156 = vmatprep.subr.mxu0 0.0
        %2157 = vmatpush1.xpose.msra.mxu0 %v2129
        %2158 = vmatprep.subr.mxu0 0.0
        %2159 = vmatpush1.xpose.msra.mxu0 %v2126
        %2160 = vmatprep.subr.mxu0 0.0
        %2161 = vmatpush1.xpose.msra.mxu0 %v2123
        %2162 = vmatprep.subr.mxu0 0.0
        %2163 = vmatpush1.xpose.msra.mxu0 %v2120
        %2164 = vmatprep.subr.mxu0 0.0
        %2165 = vmatpush1.xpose.msra.mxu0 %v2117
        %2166 = vmatprep.subr.mxu0 0.0
        %2167 = vmatpush1.xpose.msra.mxu0 %v2114
        %2168 = vmatprep.subr.mxu0 0.0
        %2169 = vmatpush1.xpose.msra.mxu0 %v2111
        %2170 = vmatprep.subr.mxu0 0.0
        %2171 = vmatpush1.xpose.msra.mxu0 %v2108
        %2172 = vmatprep.subr.mxu0 0.0
        %2173 = vmatpush1.xpose.msra.mxu0 %v2105
        %2174 = vmatprep.subr.mxu0 0.0
        %2175 = vmatpush1.xpose.msra.mxu0 %v2102
        %2176 = vmatprep.subr.mxu0 0.0
        %2177 = vmatpush1.xpose.msra.mxu0 %v2099
        %2178 = vmatprep.subr.mxu0 0.0
        %2179 = vmatpush2.xpose.msra.mxu0 0.0
        %2180 = vmatprep.subr.mxu0 0.0
        %2181 = vmatpush2.xpose.msra.mxu0 0.0
        %2182 = vmatprep.subr.mxu0 0.0
        %2183 = vmatpush2.xpose.msra.mxu0 0.0
        %2184 = vmatprep.subr.mxu0 0.0
        %2185 = vmatpush2.xpose.msra.mxu0 0.0
        %2186 = vmatprep.subr.mxu0 0.0
        %2187 = vmatpush2.xpose.msra.mxu0 0.0
        %2188 = vmatprep.subr.mxu0 0.0
        %2189 = vmatpush2.xpose.msra.mxu0 0.0
        %2190 = vmatprep.subr.mxu0 0.0
        %2191 = vmatpush2.xpose.msra.mxu0 0.0
        %2192 = vmatprep.subr.mxu0 0.0
        %2193 = vmatpush2.xpose.msra.mxu0 0.0
        %2194 = vmatprep.subr.mxu0 0.0
        %2195 = vmatpush2.xpose.msra.mxu0 0.0
        %2196 = vmatprep.subr.mxu0 0.0
        %2197 = vmatpush2.xpose.msra.mxu0 0.0
        %2198 = vmatprep.subr.mxu0 0.0
        %2199 = vmatpush2.xpose.msra.mxu0 0.0
        %2200 = vmatprep.subr.mxu0 0.0
        %2201 = vmatpush2.xpose.msra.mxu0 0.0
        %2202 = vmatprep.subr.mxu0 0.0
        %2203 = vmatpush2.xpose.msra.mxu0 0.0
        %2204 = vmatprep.subr.mxu0 0.0
        %2205 = vmatpush2.xpose.msra.mxu0 0.0
        %2206 = vmatprep.subr.mxu0 0.0
        %2207 = vmatpush2.xpose.msra.mxu0 0.0
        %2208 = vmatprep.subr.mxu0 0.0
        %2209 = vmatpush2.xpose.msra.mxu0 0.0
        %2210 = vmatprep.mubr.f32.mxu0 0.0
        %2211 = vmatmul.mubr.f32.gmra.mxu0 %v2096
        %v2212 = vpop.f32.mrf.mxu0
        %v2213 = vadd.f32 %v2092, %v2212
        %v2214 = vpop.f32.mrf.mxu0
        %2215 = vdwg.mxu0
        %2216 = vst [vmem:[%s405] sm:$0x3] %v2213
        %p2217 = scmp.lt.s32.totalorder %s25, 5
        %s2218 = scalar_select %p2217, %s25, 5
        %s2219 = smul.addr %s2218, 2
        %s2220 = scalar_lea.vmem %s11, %s2219
        // Predicated region
        $region69: #{_device_forward.2} parent=63 // pred_check
          %p2221 = pneg %p279
        $region70: #{_device_forward.2} parent=63 // pred_check_branch
          %2223 = sbr.rel (%p2221) target = $region72
        $region71: #{_device_forward.2} parent=63 // pred_region
          _
        $region72: #{_device_forward.2} parent=63 // pred_fallthru
          _
      $region64: #{_device_forward.2} parent=5 // pred_fallthru
        _
      %p2224 = scmp.le.s32.totalorder 2, %s20
      // Predicated region
      $region73: #{_device_forward.2} parent=5 // pred_check
        %p2225 = pneg %p2224
      $region74: #{_device_forward.2} parent=5 // pred_check_branch
        %2227 = sbr.rel (%p2225) target = $region76
      $region75: #{_device_forward.2} parent=5 // pred_region
        %s2228 = ssub.s32 %s20, 2
        // Predicated region
        $region77: #{_device_forward.2} parent=75 // pred_check
          %p2229 = pneg %p285
        $region78: #{_device_forward.2} parent=75 // pred_check_branch
          %2231 = sbr.rel (%p2229) target = $region80
        $region79: #{_device_forward.2} parent=75 // pred_region
          %p2232 = scmp.lt.s32.totalorder %s26, 5
          %s2233 = scalar_select %p2232, %s26, 5
          %s2234 = smul.addr %s2233, 2
          %s2235 = scalar_lea.vmem %s11, %s2234
        $region80: #{_device_forward.2} parent=75 // pred_fallthru
          _
      $region76: #{_device_forward.2} parent=5 // pred_fallthru
        _
    $region6: #{_device_forward.2} parent=1 // loop_footer
      %s24 = sadd.s32 1, %s20
    $region7: #{_device_forward.2} parent=1 // loop_footer_branch
      %19 = sbr.rel target = $region3
    $region8: #{_device_forward.2} parent=1 // loop_exit
      _
    %2236 = vsyncpa [#allocation3], 1
    %s2237 = scalar_lea.sflag [#allocation3], 1
    %2238 = vsyncpa %s2237, 1

</llo_original>
